<compile_context>
chip_gen: v6e
topology: v6e:2x2x1
jax: 0.10.0
libtpu: 0.0.40
codegen_flags: <defaults>
</compile_context>

<pallas_src>
import functools

import jax
import jax.numpy as jnp
from jax.experimental import pallas as pl
from jax.experimental.pallas import tpu as pltpu

# ----- config (mirrors `config.hidden_dim`, `config.num_layers`) -------------
HIDDEN_DIM = 32
OUT_CHANNELS = 32       # config default: out_channels = hidden_dim
NUM_LAYERS = 2          # number of *inner* convs (total convs = NUM_LAYERS + 2)
NUM_NODES = 64
NUM_EDGES = 256
NUM_GRAPHS = 4          # batch of independent graphs -> grid axis

LANE = 128
D_PAD = ((max(HIDDEN_DIM, OUT_CHANNELS) + LANE - 1) // LANE) * LANE  # 128


# ----- Pallas kernel: fused SAGE forward (all convs + ReLUs, one graph/step) --
def _make_fused_sage_kernel(num_convs, d_pad):
    def kernel(a_ref, x_ref, w_ref, b_ref, o_ref):
        # a_ref : [1, N, N]        bf16 row-normalized adjacency (this graph)
        # x_ref : [1, N, Dp]       f32 zero-padded input node features
        # w_ref : [L, 2*Dp, Dp]    bf16 per-layer vstack(lin_l.weight.T, lin_r.weight.T)
        # b_ref : [L, 1, Dp]       f32 per-layer lin_l bias (zero-padded)
        # o_ref : [1, N, Dp]       f32 lane-dense output slab (single write)
        a = a_ref[0]                              # (N, N) bf16
        h = x_ref[0]                              # (N, Dp) f32
        for l in range(num_convs):                # static unroll; only (a, h) live across layers
            hb = h.astype(jnp.bfloat16)
            agg = jnp.dot(a, hb, preferred_element_type=jnp.float32)        # mean aggregation
            z = jnp.dot(agg.astype(jnp.bfloat16), w_ref[l, :d_pad, :],
                        preferred_element_type=jnp.float32)
            z = z + jnp.dot(hb, w_ref[l, d_pad:, :],
                            preferred_element_type=jnp.float32)
            z = z + b_ref[l]
            h = jnp.maximum(z, 0.0)               # f32 epilogue (no bf16 VPU on v5e)
        o_ref[0] = h.astype(o_ref.dtype)
    return kernel


def sage_fused(adj_b, x_b, w_all, b_all):
    # adj_b : (B, N, N) bf16, x_b : (B, N, Dp) f32
    # w_all : (L, 2*Dp, Dp) bf16, b_all : (L, 1, Dp) f32
    b, n, _ = adj_b.shape
    num_convs, _, d_pad = w_all.shape
    grid_spec = pltpu.PrefetchScalarGridSpec(
        num_scalar_prefetch=0,
        grid=(b,),
        in_specs=[
            pl.BlockSpec((1, n, n), lambda g: (g, 0, 0)),
            pl.BlockSpec((1, n, d_pad), lambda g: (g, 0, 0)),
            pl.BlockSpec(w_all.shape, lambda g: (0, 0, 0)),   # weights resident
            pl.BlockSpec(b_all.shape, lambda g: (0, 0, 0)),   # bias resident
        ],
        out_specs=pl.BlockSpec((1, n, d_pad), lambda g: (g, 0, 0)),
    )
    return pl.pallas_call(
        _make_fused_sage_kernel(num_convs, d_pad),
        out_shape=jax.ShapeDtypeStruct((b, n, d_pad), jnp.float32),
        grid_spec=grid_spec,
        compiler_params=pltpu.CompilerParams(
            dimension_semantics=("parallel",),     # batch axis: megacore / 2nd TC on v7x
            vmem_limit_bytes=32 << 20,
        ),
    )(adj_b, x_b, w_all, b_all)


# ----- glue: dense normalized adjacency from edge_index (MXU one-hot matmul) --
def build_mean_adjacency(edge_index, num_nodes):
    # edge_index: [2, E] int32; row 0 = source (j), row 1 = target (i).
    # counts[i, j] = multiplicity of edge j->i; A = counts / max(in_degree, 1)
    # (matches PyG scatter-mean: isolated targets get 0; duplicate edges weighted).
    src, tgt = edge_index[0], edge_index[1]
    tgt_oh = jax.nn.one_hot(tgt, num_nodes, dtype=jnp.float32)   # (E, N)
    src_oh = jax.nn.one_hot(src, num_nodes, dtype=jnp.float32)   # (E, N)
    counts = jnp.dot(tgt_oh.T, src_oh, preferred_element_type=jnp.float32)
    deg = counts.sum(axis=1, keepdims=True)
    return counts / jnp.maximum(deg, 1.0)


# ----- parameter init (deterministic, synthetic, pre-stacked, zero-padded) ----
def init_sage_params(key, hidden, out_channels, num_layers, d_pad):
    assert out_channels == hidden, "stacked fused kernel assumes out_channels == hidden"
    num_convs = num_layers + 2
    scale = 1.0 / jnp.sqrt(jnp.float32(hidden))
    ws, bs = [], []
    for _ in range(num_convs):
        key, k1, k2 = jax.random.split(key, 3)
        w_l_t = jax.random.uniform(k1, (hidden, out_channels), jnp.float32, -scale, scale)
        w_r_t = jax.random.uniform(k2, (hidden, out_channels), jnp.float32, -scale, scale)
        # zero-pad so padded feature lanes stay exactly zero layer-to-layer
        w_l_p = jnp.zeros((d_pad, d_pad), jnp.float32).at[:hidden, :out_channels].set(w_l_t)
        w_r_p = jnp.zeros((d_pad, d_pad), jnp.float32).at[:hidden, :out_channels].set(w_r_t)
        ws.append(jnp.concatenate([w_l_p, w_r_p], axis=0))       # (2*d_pad, d_pad)
        bs.append(jnp.zeros((1, d_pad), jnp.float32))
    return jnp.stack(ws).astype(jnp.bfloat16), jnp.stack(bs)     # (L,2Dp,Dp) bf16, (L,1,Dp) f32


# ----- full forward (batched over independent graphs) --------------------------
@functools.partial(jax.jit, static_argnames=("num_nodes", "out_channels"))
def sage_forward(x, edge_index, w_all, b_all, num_nodes, out_channels):
    # x: (B, N, D) f32, edge_index: (B, 2, E) int32
    d_pad = w_all.shape[2]
    adj = jax.vmap(lambda e: build_mean_adjacency(e, num_nodes))(edge_index)
    adj = adj.astype(jnp.bfloat16)                        # bf16 MXU operand
    x_p = jnp.pad(x, ((0, 0), (0, 0), (0, d_pad - x.shape[-1])))
    out = sage_fused(adj, x_p, w_all, b_all)
    return out[:, :, :out_channels]


# ----- pure-JAX reference (same arithmetic, no Pallas) -------------------------
def sage_reference(x, edge_index, w_all, b_all, num_nodes, out_channels):
    d_pad = w_all.shape[2]
    outs = []
    for g in range(x.shape[0]):
        adj = build_mean_adjacency(edge_index[g], num_nodes).astype(jnp.bfloat16)
        h = jnp.pad(x[g], ((0, 0), (0, d_pad - x.shape[-1])))
        for l in range(w_all.shape[0]):
            hb = h.astype(jnp.bfloat16)
            agg = jnp.dot(adj, hb, preferred_element_type=jnp.float32)
            z = (jnp.dot(agg.astype(jnp.bfloat16), w_all[l, :d_pad, :],
                         preferred_element_type=jnp.float32)
                 + jnp.dot(hb, w_all[l, d_pad:, :], preferred_element_type=jnp.float32)
                 + b_all[l])
            h = jnp.maximum(z, 0.0)
        outs.append(h[:, :out_channels])
    return jnp.stack(outs)


if __name__ == "__main__":
    key = jax.random.PRNGKey(0)
    k_x, k_e, k_p = jax.random.split(key, 3)

    x = jax.random.normal(k_x, (NUM_GRAPHS, NUM_NODES, HIDDEN_DIM), jnp.float32)
    edge_index = jax.random.randint(k_e, (NUM_GRAPHS, 2, NUM_EDGES), 0, NUM_NODES, jnp.int32)
    w_all, b_all = init_sage_params(k_p, HIDDEN_DIM, OUT_CHANNELS, NUM_LAYERS, D_PAD)

    out = sage_forward(x, edge_index, w_all, b_all, NUM_NODES, OUT_CHANNELS)
    jax.block_until_ready(out)
    assert out.shape == (NUM_GRAPHS, NUM_NODES, OUT_CHANNELS)

    ref = sage_reference(x, edge_index, w_all, b_all, NUM_NODES, OUT_CHANNELS)
    assert jnp.allclose(out, ref, atol=2e-2, rtol=2e-2), "mismatch vs JAX reference"

    print("KERNEL_OK")
</pallas_src>

<mosaic_0001>
module attributes {stable_mosaic.version = 11 : i64} {
  func.func @kernel(%arg0: i32, %arg1: memref<1x64x64xbf16, #tpu.memory_space<vmem>>, %arg2: memref<1x64x128xf32, #tpu.memory_space<vmem>>, %arg3: memref<4x256x128xbf16, #tpu.memory_space<vmem>>, %arg4: memref<4x1x128xf32, #tpu.memory_space<vmem>>, %arg5: memref<1x64x128xf32, #tpu.memory_space<vmem>>) attributes {dimension_semantics = [#tpu.dimension_semantics<parallel>], iteration_bounds = array<i64: 4>, scalar_prefetch = 0 : i64, scratch_operands = 0 : i64, tpu.core_type = #tpu.core_type<tc>, window_params = [{transform_indices = @transform_0, window_bounds = array<i64: 1, 64, 64>}, {transform_indices = @transform_1, window_bounds = array<i64: 1, 64, 128>}, {pipeline_mode = #tpu.pipeline_mode<synchronous>, transform_indices = @transform_2, window_bounds = array<i64: 4, 256, 128>}, {pipeline_mode = #tpu.pipeline_mode<synchronous>, transform_indices = @transform_3, window_bounds = array<i64: 4, 1, 128>}, {transform_indices = @transform_4, window_bounds = array<i64: 1, 64, 128>}]} {
    %c0 = arith.constant 0 : index
    %c0_0 = arith.constant 0 : index
    %c0_1 = arith.constant 0 : index
    %0 = vector.load %arg1[%c0, %c0_0, %c0_1] : memref<1x64x64xbf16, #tpu.memory_space<vmem>>, vector<1x64x64xbf16>
    %1 = vector.shape_cast %0 : vector<1x64x64xbf16> to vector<64x64xbf16>
    %c0_2 = arith.constant 0 : index
    %c0_3 = arith.constant 0 : index
    %c0_4 = arith.constant 0 : index
    %2 = vector.load %arg2[%c0_2, %c0_3, %c0_4] : memref<1x64x128xf32, #tpu.memory_space<vmem>>, vector<1x64x128xf32>
    %3 = vector.shape_cast %2 : vector<1x64x128xf32> to vector<64x128xf32>
    %4 = arith.truncf %3 : vector<64x128xf32> to vector<64x128xbf16>
    %cst = arith.constant dense<0.000000e+00> : vector<64x128xf32>
    %5 = tpu.matmul %1, %4, %cst {dimension_numbers = #tpu.dot_dimension_numbers<[1], [0], [0], [1], [0, 0, 1, 1], [], []>} : vector<64x64xbf16>, vector<64x128xbf16>, vector<64x128xf32> -> vector<64x128xf32>
    %6 = arith.truncf %5 : vector<64x128xf32> to vector<64x128xbf16>
    %c0_5 = arith.constant 0 : index
    %c0_6 = arith.constant 0 : index
    %c0_7 = arith.constant 0 : index
    %7 = vector.load %arg3[%c0_5, %c0_6, %c0_7] : memref<4x256x128xbf16, #tpu.memory_space<vmem>>, vector<1x128x128xbf16>
    %8 = vector.shape_cast %7 : vector<1x128x128xbf16> to vector<128x128xbf16>
    %cst_8 = arith.constant dense<0.000000e+00> : vector<64x128xf32>
    %9 = tpu.matmul %6, %8, %cst_8 {dimension_numbers = #tpu.dot_dimension_numbers<[1], [0], [0], [1], [0, 0, 1, 1], [], []>} : vector<64x128xbf16>, vector<128x128xbf16>, vector<64x128xf32> -> vector<64x128xf32>
    %c0_9 = arith.constant 0 : index
    %c128 = arith.constant 128 : index
    %c0_10 = arith.constant 0 : index
    %10 = vector.load %arg3[%c0_9, %c128, %c0_10] : memref<4x256x128xbf16, #tpu.memory_space<vmem>>, vector<1x128x128xbf16>
    %11 = vector.shape_cast %10 : vector<1x128x128xbf16> to vector<128x128xbf16>
    %cst_11 = arith.constant dense<0.000000e+00> : vector<64x128xf32>
    %12 = tpu.matmul %4, %11, %cst_11 {dimension_numbers = #tpu.dot_dimension_numbers<[1], [0], [0], [1], [0, 0, 1, 1], [], []>} : vector<64x128xbf16>, vector<128x128xbf16>, vector<64x128xf32> -> vector<64x128xf32>
    %13 = arith.addf %9, %12 : vector<64x128xf32>
    %c0_12 = arith.constant 0 : index
    %c0_13 = arith.constant 0 : index
    %c0_14 = arith.constant 0 : index
    %14 = vector.load %arg4[%c0_12, %c0_13, %c0_14] : memref<4x1x128xf32, #tpu.memory_space<vmem>>, vector<1x1x128xf32>
    %15 = vector.shape_cast %14 : vector<1x1x128xf32> to vector<1x128xf32>
    %16 = vector.broadcast %15 : vector<1x128xf32> to vector<64x128xf32>
    %17 = arith.addf %13, %16 : vector<64x128xf32>
    %cst_15 = arith.constant 0.000000e+00 : f32
    %18 = vector.broadcast %cst_15 : f32 to vector<64x128xf32>
    %19 = arith.maximumf %17, %18 : vector<64x128xf32>
    %20 = arith.truncf %19 : vector<64x128xf32> to vector<64x128xbf16>
    %cst_16 = arith.constant dense<0.000000e+00> : vector<64x128xf32>
    %21 = tpu.matmul %1, %20, %cst_16 {dimension_numbers = #tpu.dot_dimension_numbers<[1], [0], [0], [1], [0, 0, 1, 1], [], []>} : vector<64x64xbf16>, vector<64x128xbf16>, vector<64x128xf32> -> vector<64x128xf32>
    %22 = arith.truncf %21 : vector<64x128xf32> to vector<64x128xbf16>
    %c1 = arith.constant 1 : index
    %c0_17 = arith.constant 0 : index
    %c0_18 = arith.constant 0 : index
    %23 = vector.load %arg3[%c1, %c0_17, %c0_18] : memref<4x256x128xbf16, #tpu.memory_space<vmem>>, vector<1x128x128xbf16>
    %24 = vector.shape_cast %23 : vector<1x128x128xbf16> to vector<128x128xbf16>
    %cst_19 = arith.constant dense<0.000000e+00> : vector<64x128xf32>
    %25 = tpu.matmul %22, %24, %cst_19 {dimension_numbers = #tpu.dot_dimension_numbers<[1], [0], [0], [1], [0, 0, 1, 1], [], []>} : vector<64x128xbf16>, vector<128x128xbf16>, vector<64x128xf32> -> vector<64x128xf32>
    %c1_20 = arith.constant 1 : index
    %c128_21 = arith.constant 128 : index
    %c0_22 = arith.constant 0 : index
    %26 = vector.load %arg3[%c1_20, %c128_21, %c0_22] : memref<4x256x128xbf16, #tpu.memory_space<vmem>>, vector<1x128x128xbf16>
    %27 = vector.shape_cast %26 : vector<1x128x128xbf16> to vector<128x128xbf16>
    %cst_23 = arith.constant dense<0.000000e+00> : vector<64x128xf32>
    %28 = tpu.matmul %20, %27, %cst_23 {dimension_numbers = #tpu.dot_dimension_numbers<[1], [0], [0], [1], [0, 0, 1, 1], [], []>} : vector<64x128xbf16>, vector<128x128xbf16>, vector<64x128xf32> -> vector<64x128xf32>
    %29 = arith.addf %25, %28 : vector<64x128xf32>
    %c1_24 = arith.constant 1 : index
    %c0_25 = arith.constant 0 : index
    %c0_26 = arith.constant 0 : index
    %30 = vector.load %arg4[%c1_24, %c0_25, %c0_26] : memref<4x1x128xf32, #tpu.memory_space<vmem>>, vector<1x1x128xf32>
    %31 = vector.shape_cast %30 : vector<1x1x128xf32> to vector<1x128xf32>
    %32 = vector.broadcast %31 : vector<1x128xf32> to vector<64x128xf32>
    %33 = arith.addf %29, %32 : vector<64x128xf32>
    %cst_27 = arith.constant 0.000000e+00 : f32
    %34 = vector.broadcast %cst_27 : f32 to vector<64x128xf32>
    %35 = arith.maximumf %33, %34 : vector<64x128xf32>
    %36 = arith.truncf %35 : vector<64x128xf32> to vector<64x128xbf16>
    %cst_28 = arith.constant dense<0.000000e+00> : vector<64x128xf32>
    %37 = tpu.matmul %1, %36, %cst_28 {dimension_numbers = #tpu.dot_dimension_numbers<[1], [0], [0], [1], [0, 0, 1, 1], [], []>} : vector<64x64xbf16>, vector<64x128xbf16>, vector<64x128xf32> -> vector<64x128xf32>
    %38 = arith.truncf %37 : vector<64x128xf32> to vector<64x128xbf16>
    %c2 = arith.constant 2 : index
    %c0_29 = arith.constant 0 : index
    %c0_30 = arith.constant 0 : index
    %39 = vector.load %arg3[%c2, %c0_29, %c0_30] : memref<4x256x128xbf16, #tpu.memory_space<vmem>>, vector<1x128x128xbf16>
    %40 = vector.shape_cast %39 : vector<1x128x128xbf16> to vector<128x128xbf16>
    %cst_31 = arith.constant dense<0.000000e+00> : vector<64x128xf32>
    %41 = tpu.matmul %38, %40, %cst_31 {dimension_numbers = #tpu.dot_dimension_numbers<[1], [0], [0], [1], [0, 0, 1, 1], [], []>} : vector<64x128xbf16>, vector<128x128xbf16>, vector<64x128xf32> -> vector<64x128xf32>
    %c2_32 = arith.constant 2 : index
    %c128_33 = arith.constant 128 : index
    %c0_34 = arith.constant 0 : index
    %42 = vector.load %arg3[%c2_32, %c128_33, %c0_34] : memref<4x256x128xbf16, #tpu.memory_space<vmem>>, vector<1x128x128xbf16>
    %43 = vector.shape_cast %42 : vector<1x128x128xbf16> to vector<128x128xbf16>
    %cst_35 = arith.constant dense<0.000000e+00> : vector<64x128xf32>
    %44 = tpu.matmul %36, %43, %cst_35 {dimension_numbers = #tpu.dot_dimension_numbers<[1], [0], [0], [1], [0, 0, 1, 1], [], []>} : vector<64x128xbf16>, vector<128x128xbf16>, vector<64x128xf32> -> vector<64x128xf32>
    %45 = arith.addf %41, %44 : vector<64x128xf32>
    %c2_36 = arith.constant 2 : index
    %c0_37 = arith.constant 0 : index
    %c0_38 = arith.constant 0 : index
    %46 = vector.load %arg4[%c2_36, %c0_37, %c0_38] : memref<4x1x128xf32, #tpu.memory_space<vmem>>, vector<1x1x128xf32>
    %47 = vector.shape_cast %46 : vector<1x1x128xf32> to vector<1x128xf32>
    %48 = vector.broadcast %47 : vector<1x128xf32> to vector<64x128xf32>
    %49 = arith.addf %45, %48 : vector<64x128xf32>
    %cst_39 = arith.constant 0.000000e+00 : f32
    %50 = vector.broadcast %cst_39 : f32 to vector<64x128xf32>
    %51 = arith.maximumf %49, %50 : vector<64x128xf32>
    %52 = arith.truncf %51 : vector<64x128xf32> to vector<64x128xbf16>
    %cst_40 = arith.constant dense<0.000000e+00> : vector<64x128xf32>
    %53 = tpu.matmul %1, %52, %cst_40 {dimension_numbers = #tpu.dot_dimension_numbers<[1], [0], [0], [1], [0, 0, 1, 1], [], []>} : vector<64x64xbf16>, vector<64x128xbf16>, vector<64x128xf32> -> vector<64x128xf32>
    %54 = arith.truncf %53 : vector<64x128xf32> to vector<64x128xbf16>
    %c3 = arith.constant 3 : index
    %c0_41 = arith.constant 0 : index
    %c0_42 = arith.constant 0 : index
    %55 = vector.load %arg3[%c3, %c0_41, %c0_42] : memref<4x256x128xbf16, #tpu.memory_space<vmem>>, vector<1x128x128xbf16>
    %56 = vector.shape_cast %55 : vector<1x128x128xbf16> to vector<128x128xbf16>
    %cst_43 = arith.constant dense<0.000000e+00> : vector<64x128xf32>
    %57 = tpu.matmul %54, %56, %cst_43 {dimension_numbers = #tpu.dot_dimension_numbers<[1], [0], [0], [1], [0, 0, 1, 1], [], []>} : vector<64x128xbf16>, vector<128x128xbf16>, vector<64x128xf32> -> vector<64x128xf32>
    %c3_44 = arith.constant 3 : index
    %c128_45 = arith.constant 128 : index
    %c0_46 = arith.constant 0 : index
    %58 = vector.load %arg3[%c3_44, %c128_45, %c0_46] : memref<4x256x128xbf16, #tpu.memory_space<vmem>>, vector<1x128x128xbf16>
    %59 = vector.shape_cast %58 : vector<1x128x128xbf16> to vector<128x128xbf16>
    %cst_47 = arith.constant dense<0.000000e+00> : vector<64x128xf32>
    %60 = tpu.matmul %52, %59, %cst_47 {dimension_numbers = #tpu.dot_dimension_numbers<[1], [0], [0], [1], [0, 0, 1, 1], [], []>} : vector<64x128xbf16>, vector<128x128xbf16>, vector<64x128xf32> -> vector<64x128xf32>
    %61 = arith.addf %57, %60 : vector<64x128xf32>
    %c3_48 = arith.constant 3 : index
    %c0_49 = arith.constant 0 : index
    %c0_50 = arith.constant 0 : index
    %62 = vector.load %arg4[%c3_48, %c0_49, %c0_50] : memref<4x1x128xf32, #tpu.memory_space<vmem>>, vector<1x1x128xf32>
    %63 = vector.shape_cast %62 : vector<1x1x128xf32> to vector<1x128xf32>
    %64 = vector.broadcast %63 : vector<1x128xf32> to vector<64x128xf32>
    %65 = arith.addf %61, %64 : vector<64x128xf32>
    %cst_51 = arith.constant 0.000000e+00 : f32
    %66 = vector.broadcast %cst_51 : f32 to vector<64x128xf32>
    %67 = arith.maximumf %65, %66 : vector<64x128xf32>
    %c0_52 = arith.constant 0 : index
    %c0_53 = arith.constant 0 : index
    %c0_54 = arith.constant 0 : index
    %68 = vector.load %arg5[%c0_52, %c0_53, %c0_54] : memref<1x64x128xf32, #tpu.memory_space<vmem>>, vector<1x64x128xf32>
    %69 = vector.shape_cast %68 : vector<1x64x128xf32> to vector<64x128xf32>
    %70 = vector.shape_cast %67 : vector<64x128xf32> to vector<1x64x128xf32>
    tpu.vector_store %arg5[%c0_52, %c0_53, %c0_54], %70 {strides = array<i32>} : memref<1x64x128xf32, #tpu.memory_space<vmem>>, vector<1x64x128xf32>,
    return
  }
  func.func @transform_0(%arg0: i32) -> (i32, i32, i32) {
    %c0_i32 = arith.constant 0 : i32
    %c0_i32_0 = arith.constant 0 : i32
    %c0_i32_1 = arith.constant 0 : i32
    return %arg0, %c0_i32, %c0_i32_0 : i32, i32, i32
  }
  func.func @transform_1(%arg0: i32) -> (i32, i32, i32) {
    %c0_i32 = arith.constant 0 : i32
    %c0_i32_0 = arith.constant 0 : i32
    %c0_i32_1 = arith.constant 0 : i32
    return %arg0, %c0_i32, %c0_i32_0 : i32, i32, i32
  }
  func.func @transform_2(%arg0: i32) -> (i32, i32, i32) {
    %c0_i32 = arith.constant 0 : i32
    %c0_i32_0 = arith.constant 0 : i32
    %c0_i32_1 = arith.constant 0 : i32
    %c0_i32_2 = arith.constant 0 : i32
    return %c0_i32, %c0_i32_0, %c0_i32_1 : i32, i32, i32
  }
  func.func @transform_3(%arg0: i32) -> (i32, i32, i32) {
    %c0_i32 = arith.constant 0 : i32
    %c0_i32_0 = arith.constant 0 : i32
    %c0_i32_1 = arith.constant 0 : i32
    %c0_i32_2 = arith.constant 0 : i32
    return %c0_i32, %c0_i32_0, %c0_i32_1 : i32, i32, i32
  }
  func.func @transform_4(%arg0: i32) -> (i32, i32, i32) {
    %c0_i32 = arith.constant 0 : i32
    %c0_i32_0 = arith.constant 0 : i32
    %c0_i32_1 = arith.constant 0 : i32
    return %arg0, %c0_i32, %c0_i32_0 : i32, i32, i32
  }
}

</mosaic_0001>

<llo_original>
// kernel: sage_forward.1
$region0: #{sage_forward.1}
  #allocation0 [shape = 'u32[]', space=smem, size = 0x4, offset = 0x4, fixed_abs, tag = 'smem constant byte address 0x4 - core index']
  #allocation1 [shape = 'u32[144,128]{1,0:T(1,128)}', space=vmem, size = 0x12000, scoped, tag = 'internal scratch']
  %s0 = inlined_call_operand.vmem [shape: bf16[4,64,64], index: 0, kind: input, shape index: {}]
  %s1 = inlined_call_operand.vmem [shape: f32[4,64,128], index: 1, kind: input, shape index: {}]
  %s2 = inlined_call_operand.vmem [shape: bf16[4,256,128], index: 2, kind: input, shape index: {}]
  %s3 = inlined_call_operand.vmem [shape: f32[4,1,128], index: 3, kind: input, shape index: {}]
  %s4 = inlined_call_operand.vmem [shape: f32[4,64,128], index: 4, kind: output, shape index: {}]
  %s5 = sld [smem:[#allocation0]]
  $region49: #{sage_forward.1} parent=0
    _
  %s7 = ssub.s32 1, %s5
  %s8 = scalar_select 0, %s7, %s5
  loop: start=0, step=1, limit=6
  $region2: #{sage_forward.1} parent=0 // loop_pre_header
    _
  $region3: #{sage_forward.1} parent=0 // loop_header
    %s10 = sphi 0, %s14
    %p11 = scmp.ge.s32.totalorder %s10, 6
    %s20 = sphi 0, %s22
    %s23 = sphi 0, %s20
    %s24 = sphi 0, %s23
    %s40 = sphi 0, %s24
    %s46 = sphi 0, %s48
    %s49 = sphi 0, %s46
    %s50 = sphi 0, %s49
    %s66 = sphi 0, %s50
    %s70 = sphi 0, %s70
    %s72 = sphi 0, %s70
    %s73 = sphi 0, %s72
    %s87 = sphi 0, %s73
    %s91 = sphi 0, %s91
    %s93 = sphi 0, %s91
    %s94 = sphi 0, %s93
    %s108 = sphi 0, %s94
    %s114 = sphi 0, %s116
    %s117 = sphi 0, %s114
    %s118 = sphi 0, %s117
    %s134 = sphi 0, %s118
  $region4: #{sage_forward.1} parent=0 // loop_header_branch
    %13 = sbr.rel (%p11) target = $region8
  $region5: #{sage_forward.1} parent=0 // loop_body
    %s15 = ssub.s32 %s10, 1
    %s16 = ssub.s32 %s10, 2
    %s17 = sadd.s32 %s10, 1
    %s18 = ssub.s32 %s10, %s17
    %p19 = scmp.eq.s32.totalorder %s18, 0
    %s21 = sadd.s32 %s20, 1
    %s22 = scalar_select %p19, %s20, %s21
    %p25 = pneg %p19
    %p26 = scmp.eq.s32.totalorder %s10, 3
    %p27 = por %p25, %p26
    %p28 = scmp.ne.s32.totalorder %s20, %s23
    %p29 = scmp.eq.s32.totalorder %s10, 0
    %p30 = por %p28, %p29
    %p31 = scmp.ne.s32.totalorder %s20, %s23
    %p32 = scmp.eq.s32.totalorder %s15, 3
    %p33 = por %p31, %p32
    %p34 = scmp.ne.s32.totalorder %s23, %s24
    %p35 = scmp.eq.s32.totalorder %s15, 0
    %p36 = por %p34, %p35
    %p37 = scmp.ne.s32.totalorder %s23, %s24
    %p38 = scmp.eq.s32.totalorder %s16, 3
    %p39 = por %p37, %p38
    %p41 = scmp.ne.s32.totalorder %s24, %s40
    %p42 = scmp.eq.s32.totalorder %s16, 0
    %p43 = por %p41, %p42
    %s44 = ssub.s32 %s10, %s17
    %p45 = scmp.eq.s32.totalorder %s44, 0
    %s47 = sadd.s32 %s46, 1
    %s48 = scalar_select %p45, %s46, %s47
    %p51 = pneg %p45
    %p52 = scmp.eq.s32.totalorder %s10, 3
    %p53 = por %p51, %p52
    %p54 = scmp.ne.s32.totalorder %s46, %s49
    %p55 = scmp.eq.s32.totalorder %s10, 0
    %p56 = por %p54, %p55
    %p57 = scmp.ne.s32.totalorder %s46, %s49
    %p58 = scmp.eq.s32.totalorder %s15, 3
    %p59 = por %p57, %p58
    %p60 = scmp.ne.s32.totalorder %s49, %s50
    %p61 = scmp.eq.s32.totalorder %s15, 0
    %p62 = por %p60, %p61
    %p63 = scmp.ne.s32.totalorder %s49, %s50
    %p64 = scmp.eq.s32.totalorder %s16, 3
    %p65 = por %p63, %p64
    %p67 = scmp.ne.s32.totalorder %s50, %s66
    %p68 = scmp.eq.s32.totalorder %s16, 0
    %p69 = por %p67, %p68
    %s71 = sadd.s32 %s70, 1
    %p74 = scmp.eq.s32.totalorder %s10, 3
    %p75 = scmp.ne.s32.totalorder %s70, %s72
    %p76 = scmp.eq.s32.totalorder %s10, 0
    %p77 = por %p75, %p76
    %p78 = scmp.ne.s32.totalorder %s70, %s72
    %p79 = scmp.eq.s32.totalorder %s15, 3
    %p80 = por %p78, %p79
    %p81 = scmp.ne.s32.totalorder %s72, %s73
    %p82 = scmp.eq.s32.totalorder %s15, 0
    %p83 = por %p81, %p82
    %p84 = scmp.ne.s32.totalorder %s72, %s73
    %p85 = scmp.eq.s32.totalorder %s16, 3
    %p86 = por %p84, %p85
    %p88 = scmp.ne.s32.totalorder %s73, %s87
    %p89 = scmp.eq.s32.totalorder %s16, 0
    %p90 = por %p88, %p89
    %s92 = sadd.s32 %s91, 1
    %p95 = scmp.eq.s32.totalorder %s10, 3
    %p96 = scmp.ne.s32.totalorder %s91, %s93
    %p97 = scmp.eq.s32.totalorder %s10, 0
    %p98 = por %p96, %p97
    %p99 = scmp.ne.s32.totalorder %s91, %s93
    %p100 = scmp.eq.s32.totalorder %s15, 3
    %p101 = por %p99, %p100
    %p102 = scmp.ne.s32.totalorder %s93, %s94
    %p103 = scmp.eq.s32.totalorder %s15, 0
    %p104 = por %p102, %p103
    %p105 = scmp.ne.s32.totalorder %s93, %s94
    %p106 = scmp.eq.s32.totalorder %s16, 3
    %p107 = por %p105, %p106
    %p109 = scmp.ne.s32.totalorder %s94, %s108
    %p110 = scmp.eq.s32.totalorder %s16, 0
    %p111 = por %p109, %p110
    %s112 = ssub.s32 %s10, %s17
    %p113 = scmp.eq.s32.totalorder %s112, 0
    %s115 = sadd.s32 %s114, 1
    %s116 = scalar_select %p113, %s114, %s115
    %p119 = pneg %p113
    %p120 = scmp.eq.s32.totalorder %s10, 3
    %p121 = por %p119, %p120
    %p122 = scmp.ne.s32.totalorder %s114, %s117
    %p123 = scmp.eq.s32.totalorder %s10, 0
    %p124 = por %p122, %p123
    %p125 = scmp.ne.s32.totalorder %s114, %s117
    %p126 = scmp.eq.s32.totalorder %s15, 3
    %p127 = por %p125, %p126
    %p128 = scmp.ne.s32.totalorder %s117, %s118
    %p129 = scmp.eq.s32.totalorder %s15, 0
    %p130 = por %p128, %p129
    %p131 = scmp.ne.s32.totalorder %s117, %s118
    %p132 = scmp.eq.s32.totalorder %s16, 3
    %p133 = por %p131, %p132
    %p135 = scmp.ne.s32.totalorder %s118, %s134
    %p136 = scmp.eq.s32.totalorder %s16, 0
    %p137 = por %p135, %p136
    %p138 = scmp.le.s32.totalorder 1, %s10
    %p139 = scmp.lt.s32.totalorder %s10, 5
    %p140 = pnand %p138, %p139
    %p141 = pneg %p140
    // Predicated region
    $region9: #{sage_forward.1} parent=5 // pred_check
      _
    $region10: #{sage_forward.1} parent=5 // pred_check_branch
      %143 = sbr.rel (%p140) target = $region12
    $region11: #{sage_forward.1} parent=5 // pred_region
      %s144 = ssub.s32 %s10, 1
      // Predicated region
      $region13: #{sage_forward.1} parent=11 // pred_check
        %p145 = pneg %p83
      $region14: #{sage_forward.1} parent=11 // pred_check_branch
        %147 = sbr.rel (%p145) target = $region16
      $region15: #{sage_forward.1} parent=11 // pred_region
        _
      $region16: #{sage_forward.1} parent=11 // pred_fallthru
        _
      // Predicated region
      $region17: #{sage_forward.1} parent=11 // pred_check
        %p148 = pneg %p104
      $region18: #{sage_forward.1} parent=11 // pred_check_branch
        %150 = sbr.rel (%p148) target = $region20
      $region19: #{sage_forward.1} parent=11 // pred_region
        _
      $region20: #{sage_forward.1} parent=11 // pred_fallthru
        _
    $region12: #{sage_forward.1} parent=5 // pred_fallthru
      _
    %p151 = scmp.lt.s32.totalorder %s10, 4
    // Predicated region
    $region21: #{sage_forward.1} parent=5 // pred_check
      %p152 = pneg %p151
    $region22: #{sage_forward.1} parent=5 // pred_check_branch
      %154 = sbr.rel (%p152) target = $region24
    $region23: #{sage_forward.1} parent=5 // pred_region
      // Predicated region
      $region25: #{sage_forward.1} parent=23 // pred_check
        %p155 = pneg %p30
      $region26: #{sage_forward.1} parent=23 // pred_check_branch
        %157 = sbr.rel (%p155) target = $region28
      $region27: #{sage_forward.1} parent=23 // pred_region
        %p158 = scmp.lt.s32.totalorder %s10, 3
        %s159 = scalar_select %p158, %s10, 3
        %s160 = smul.addr %s159, 8
        %s161 = smul.addr %s160, 4
        %s162 = scalar_lea.vmem %s0, %s161
      $region28: #{sage_forward.1} parent=23 // pred_fallthru
        _
      // Predicated region
      $region29: #{sage_forward.1} parent=23 // pred_check
        %p163 = pneg %p56
      $region30: #{sage_forward.1} parent=23 // pred_check_branch
        %165 = sbr.rel (%p163) target = $region32
      $region31: #{sage_forward.1} parent=23 // pred_region
        %p166 = scmp.lt.s32.totalorder %s10, 3
        %s167 = scalar_select %p166, %s10, 3
        %s168 = smul.addr %s167, 8
        %s169 = smul.addr %s168, 8
        %s170 = scalar_lea.vmem %s1, %s169
      $region32: #{sage_forward.1} parent=23 // pred_fallthru
        _
    $region24: #{sage_forward.1} parent=5 // pred_fallthru
      _
    %p171 = scmp.le.s32.totalorder 1, %s10
    %p172 = scmp.lt.s32.totalorder %s10, 5
    %p173 = pnand %p171, %p172
    %p174 = pneg %p173
    // Predicated region
    $region33: #{sage_forward.1} parent=5 // pred_check
      _
    $region34: #{sage_forward.1} parent=5 // pred_check_branch
      %176 = sbr.rel (%p173) target = $region36
    $region35: #{sage_forward.1} parent=5 // pred_region
      %s177 = ssub.s32 %s10, 1
      %p178 = scmp.lt.s32.totalorder %s15, 3
      %s179 = scalar_select %p178, %s15, 3
      %s180 = smul.addr %s179, 8
      %s181 = smul.addr %s180, 4
      %s182 = scalar_lea.vmem %s0, %s181
      %p183 = pneg %p36
      %p184 = pneg %p33
      %p185 = scmp.lt.s32.totalorder %s15, 3
      %s186 = scalar_select %p185, %s15, 3
      %s187 = smul.addr %s186, 8
      %s188 = smul.addr %s187, 8
      %s189 = scalar_lea.vmem %s1, %s188
      %p190 = pneg %p62
      %p191 = pneg %p59
      %p192 = pneg %p83
      %p193 = pneg %p80
      %p194 = pneg %p104
      %p195 = pneg %p101
      %p196 = pneg %p130
      %p197 = pneg %p127
      %p198 = scmp.lt.s32.totalorder %s15, 3
      %s199 = scalar_select %p198, %s15, 3
      %s200 = smul.addr %s199, 8
      %s201 = smul.addr %s200, 8
      %s202 = scalar_lea.vmem %s4, %s201
      %p203 = scmp.lt.s32.totalorder %s15, 3
      %s204 = scalar_select %p203, %s15, 3
      %s205 = smul.addr %s204, 8
      %s206 = smul.addr %s205, 4
      %s207 = scalar_lea.vmem %s0, %s206
      %p208 = scmp.lt.s32.totalorder %s15, 3
      %s209 = scalar_select %p208, %s15, 3
      %s210 = smul.addr %s209, 8
      %s211 = smul.addr %s210, 8
      %s212 = scalar_lea.vmem %s1, %s211
      %p213 = scmp.lt.s32.totalorder %s15, 3
      %s214 = scalar_select %p213, %s15, 3
      %s215 = smul.addr %s214, 8
      %s216 = smul.addr %s215, 8
      %s217 = scalar_lea.vmem %s4, %s216
      %v219 = vld [vmem:[%s207] sm:$0xf]
      %v220 = vld [vmem:[%s207 + $0x4] sm:$0xf]
      %v221 = vld [vmem:[%s207 + $0x8] sm:$0xf]
      %v222 = vld [vmem:[%s207 + $0xc] sm:$0xf]
      %v223 = vld [vmem:[%s207 + $0x10] sm:$0xf]
      %v224 = vld [vmem:[%s207 + $0x14] sm:$0xf]
      %v225 = vld [vmem:[%s207 + $0x18] sm:$0xf]
      %v226 = vld [vmem:[%s207 + $0x1c] sm:$0xf]
      %v227 = vld [vmem:[%s212] sm:$0xff]
      %v228 = vld [vmem:[%s212 + $0x8] sm:$0xff]
      %v229 = vld [vmem:[%s212 + $0x10] sm:$0xff]
      %v230 = vld [vmem:[%s212 + $0x18] sm:$0xff]
      %v231 = vld [vmem:[%s212 + $0x20] sm:$0xff]
      %v232 = vld [vmem:[%s212 + $0x28] sm:$0xff]
      %v233 = vld [vmem:[%s212 + $0x30] sm:$0xff]
      %v234 = vld [vmem:[%s212 + $0x38] sm:$0xff]
      %v235 = vpack.c.bf16 %v228, %v227
      %v236 = vpack.c.bf16 %v230, %v229
      %v237 = vpack.c.bf16 %v232, %v231
      %v238 = vpack.c.bf16 %v234, %v233
      %v247 = vunpack.c.l.b16 %v219
      %v248 = vunpack.c.l.b16 %v220
      %v249 = vunpack.c.l.b16 %v221
      %v250 = vunpack.c.l.b16 %v222
      %v251 = vunpack.c.l.b16 %v223
      %v252 = vunpack.c.l.b16 %v224
      %v253 = vunpack.c.l.b16 %v225
      %v254 = vunpack.c.l.b16 %v226
      %v255 = vpack.c.b16 %v248, %v247
      %v256 = vpack.c.b16 %v250, %v249
      %v257 = vpack.c.b16 %v252, %v251
      %v258 = vpack.c.b16 %v254, %v253
      %vm259 = vcmask 523264
      %v261 = vsel %vm259, %v255, 0
      %v264 = vsel %vm259, %v256, 0
      %v267 = vsel %vm259, %v257, 0
      %v270 = vsel %vm259, %v258, 0
      %272 = vmatprep.subr.bf16.mxu0 0
      %273 = vmatpush1.bf16.msra.mxu0 0
      %274 = vmatprep.subr.bf16.mxu0 0
      %275 = vmatpush1.bf16.msra.mxu0 0
      %276 = vmatprep.subr.bf16.mxu0 0
      %277 = vmatpush1.bf16.msra.mxu0 0
      %278 = vmatprep.subr.bf16.mxu0 0
      %279 = vmatpush1.bf16.msra.mxu0 0
      %280 = vmatprep.subr.bf16.mxu0 0
      %281 = vmatpush1.bf16.msra.mxu0 %v238
      %282 = vmatprep.subr.bf16.mxu0 0
      %283 = vmatpush1.bf16.msra.mxu0 %v237
      %284 = vmatprep.subr.bf16.mxu0 0
      %285 = vmatpush1.bf16.msra.mxu0 %v236
      %286 = vmatprep.subr.bf16.mxu0 0
      %287 = vmatpush1.bf16.msra.mxu0 %v235
      %288 = vmatprep.subr.bf16.mxu0 0
      %289 = vmatpush2.bf16.msra.mxu0 0
      %290 = vmatprep.subr.bf16.mxu0 0
      %291 = vmatpush2.bf16.msra.mxu0 0
      %292 = vmatprep.subr.bf16.mxu0 0
      %293 = vmatpush2.bf16.msra.mxu0 0
      %294 = vmatprep.subr.bf16.mxu0 0
      %295 = vmatpush2.bf16.msra.mxu0 0
      %296 = vmatprep.subr.bf16.mxu0 0
      %297 = vmatpush2.bf16.msra.mxu0 0
      %298 = vmatprep.subr.bf16.mxu0 0
      %299 = vmatpush2.bf16.msra.mxu0 0
      %300 = vmatprep.subr.bf16.mxu0 0
      %301 = vmatpush2.bf16.msra.mxu0 0
      %302 = vmatprep.subr.bf16.mxu0 0
      %303 = vmatpush2.bf16.msra.mxu0 0
      %304 = vmatprep.mubr.bf16.mxu0 0
      %305 = vmatmul.mubr.bf16.gmra.mxu0 %v261
      %v306 = vpop.f32.mrf.mxu0
      %v307 = vadd.f32 0.0, %v306
      %v308 = vpop.f32.mrf.mxu0
      %v309 = vpop.f32.mrf.mxu0
      %v310 = vadd.f32 0.0, %v309
      %v311 = vpop.f32.mrf.mxu0
      %312 = vmatprep.mubr.bf16.mxu0 0
      %313 = vmatmul.mubr.bf16.gmra.mxu0 %v264
      %v314 = vpop.f32.mrf.mxu0
      %v315 = vadd.f32 0.0, %v314
      %v316 = vpop.f32.mrf.mxu0
      %v317 = vpop.f32.mrf.mxu0
      %v318 = vadd.f32 0.0, %v317
      %v319 = vpop.f32.mrf.mxu0
      %320 = vmatprep.mubr.bf16.mxu0 0
      %321 = vmatmul.mubr.bf16.gmra.mxu0 %v267
      %v322 = vpop.f32.mrf.mxu0
      %v323 = vadd.f32 0.0, %v322
      %v324 = vpop.f32.mrf.mxu0
      %v325 = vpop.f32.mrf.mxu0
      %v326 = vadd.f32 0.0, %v325
      %v327 = vpop.f32.mrf.mxu0
      %328 = vmatprep.mubr.bf16.mxu0 0
      %329 = vmatmul.mubr.bf16.gmra.mxu0 %v270
      %v330 = vpop.f32.mrf.mxu0
      %v331 = vadd.f32 0.0, %v330
      %v332 = vpop.f32.mrf.mxu0
      %v333 = vpop.f32.mrf.mxu0
      %v334 = vadd.f32 0.0, %v333
      %v335 = vpop.f32.mrf.mxu0
      %336 = vdwg.mxu0
      %v337 = vpack.c.bf16 %v310, %v307
      %v338 = vpack.c.bf16 %v318, %v315
      %v339 = vpack.c.bf16 %v326, %v323
      %v340 = vpack.c.bf16 %v334, %v331
      %v341 = vld [vmem:[%s2] sm:$0xf]
      %v342 = vld [vmem:[%s2 + $0x4] sm:$0xf]
      %v343 = vld [vmem:[%s2 + $0x8] sm:$0xf]
      %v344 = vld [vmem:[%s2 + $0xc] sm:$0xf]
      %v345 = vld [vmem:[%s2 + $0x10] sm:$0xf]
      %v346 = vld [vmem:[%s2 + $0x14] sm:$0xf]
      %v347 = vld [vmem:[%s2 + $0x18] sm:$0xf]
      %v348 = vld [vmem:[%s2 + $0x1c] sm:$0xf]
      %v349 = vld [vmem:[%s2 + $0x20] sm:$0xf]
      %v350 = vld [vmem:[%s2 + $0x24] sm:$0xf]
      %v351 = vld [vmem:[%s2 + $0x28] sm:$0xf]
      %v352 = vld [vmem:[%s2 + $0x2c] sm:$0xf]
      %v353 = vld [vmem:[%s2 + $0x30] sm:$0xf]
      %v354 = vld [vmem:[%s2 + $0x34] sm:$0xf]
      %v355 = vld [vmem:[%s2 + $0x38] sm:$0xf]
      %v356 = vld [vmem:[%s2 + $0x3c] sm:$0xf]
      %v357 = vld [vmem:[%s2 + $0x40] sm:$0xf]
      %v358 = vld [vmem:[%s2 + $0x44] sm:$0xf]
      %v359 = vld [vmem:[%s2 + $0x48] sm:$0xf]
      %v360 = vld [vmem:[%s2 + $0x4c] sm:$0xf]
      %v361 = vld [vmem:[%s2 + $0x50] sm:$0xf]
      %v362 = vld [vmem:[%s2 + $0x54] sm:$0xf]
      %v363 = vld [vmem:[%s2 + $0x58] sm:$0xf]
      %v364 = vld [vmem:[%s2 + $0x5c] sm:$0xf]
      %v365 = vld [vmem:[%s2 + $0x60] sm:$0xf]
      %v366 = vld [vmem:[%s2 + $0x64] sm:$0xf]
      %v367 = vld [vmem:[%s2 + $0x68] sm:$0xf]
      %v368 = vld [vmem:[%s2 + $0x6c] sm:$0xf]
      %v369 = vld [vmem:[%s2 + $0x70] sm:$0xf]
      %v370 = vld [vmem:[%s2 + $0x74] sm:$0xf]
      %v371 = vld [vmem:[%s2 + $0x78] sm:$0xf]
      %v372 = vld [vmem:[%s2 + $0x7c] sm:$0xf]
      %v389 = vunpack.c.l.b16 %v357
      %v390 = vunpack.c.l.b16 %v358
      %v391 = vunpack.c.l.b16 %v359
      %v392 = vunpack.c.l.b16 %v360
      %v393 = vunpack.c.l.b16 %v361
      %v394 = vunpack.c.l.b16 %v362
      %v395 = vunpack.c.l.b16 %v363
      %v396 = vunpack.c.l.b16 %v364
      %v397 = vunpack.c.l.b16 %v365
      %v398 = vunpack.c.l.b16 %v366
      %v399 = vunpack.c.l.b16 %v367
      %v400 = vunpack.c.l.b16 %v368
      %v401 = vunpack.c.l.b16 %v369
      %v402 = vunpack.c.l.b16 %v370
      %v403 = vunpack.c.l.b16 %v371
      %v404 = vunpack.c.l.b16 %v372
      %v405 = vpack.c.b16 %v390, %v389
      %v406 = vpack.c.b16 %v392, %v391
      %v407 = vpack.c.b16 %v394, %v393
      %v408 = vpack.c.b16 %v396, %v395
      %v409 = vpack.c.b16 %v398, %v397
      %v410 = vpack.c.b16 %v400, %v399
      %v411 = vpack.c.b16 %v402, %v401
      %v412 = vpack.c.b16 %v404, %v403
      %421 = vmatprep.subr.bf16.mxu0 0
      %422 = vmatpush1.bf16.msra.mxu0 %v412
      %423 = vmatprep.subr.bf16.mxu0 0
      %424 = vmatpush1.bf16.msra.mxu0 %v411
      %425 = vmatprep.subr.bf16.mxu0 0
      %426 = vmatpush1.bf16.msra.mxu0 %v410
      %427 = vmatprep.subr.bf16.mxu0 0
      %428 = vmatpush1.bf16.msra.mxu0 %v409
      %429 = vmatprep.subr.bf16.mxu0 0
      %430 = vmatpush1.bf16.msra.mxu0 %v408
      %431 = vmatprep.subr.bf16.mxu0 0
      %432 = vmatpush1.bf16.msra.mxu0 %v407
      %433 = vmatprep.subr.bf16.mxu0 0
      %434 = vmatpush1.bf16.msra.mxu0 %v406
      %435 = vmatprep.subr.bf16.mxu0 0
      %436 = vmatpush1.bf16.msra.mxu0 %v405
      %437 = vmatprep.subr.bf16.mxu0 0
      %438 = vmatpush2.bf16.msra.mxu0 0
      %439 = vmatprep.subr.bf16.mxu0 0
      %440 = vmatpush2.bf16.msra.mxu0 0
      %441 = vmatprep.subr.bf16.mxu0 0
      %442 = vmatpush2.bf16.msra.mxu0 0
      %443 = vmatprep.subr.bf16.mxu0 0
      %444 = vmatpush2.bf16.msra.mxu0 0
      %445 = vmatprep.subr.bf16.mxu0 0
      %446 = vmatpush2.bf16.msra.mxu0 0
      %447 = vmatprep.subr.bf16.mxu0 0
      %448 = vmatpush2.bf16.msra.mxu0 0
      %449 = vmatprep.subr.bf16.mxu0 0
      %450 = vmatpush2.bf16.msra.mxu0 0
      %451 = vmatprep.subr.bf16.mxu0 0
      %452 = vmatpush2.bf16.msra.mxu0 0
      %453 = vmatprep.mubr.bf16.mxu0 0
      %454 = vmatmul.mubr.bf16.gmra.mxu0 %v235
      %v455 = vpop.f32.mrf.mxu0
      %v456 = vadd.f32 0.0, %v455
      %v457 = vpop.f32.mrf.mxu0
      %v458 = vpop.f32.mrf.mxu0
      %v459 = vadd.f32 0.0, %v458
      %v460 = vpop.f32.mrf.mxu0
      %461 = vmatprep.mubr.bf16.mxu0 0
      %462 = vmatmul.mubr.bf16.gmra.mxu0 %v236
      %v463 = vpop.f32.mrf.mxu0
      %v464 = vadd.f32 0.0, %v463
      %v465 = vpop.f32.mrf.mxu0
      %v466 = vpop.f32.mrf.mxu0
      %v467 = vadd.f32 0.0, %v466
      %v468 = vpop.f32.mrf.mxu0
      %469 = vmatprep.mubr.bf16.mxu0 0
      %470 = vmatmul.mubr.bf16.gmra.mxu0 %v237
      %v471 = vpop.f32.mrf.mxu0
      %v472 = vadd.f32 0.0, %v471
      %v473 = vpop.f32.mrf.mxu0
      %v474 = vpop.f32.mrf.mxu0
      %v475 = vadd.f32 0.0, %v474
      %v476 = vpop.f32.mrf.mxu0
      %477 = vmatprep.mubr.bf16.mxu0 0
      %478 = vmatmul.mubr.bf16.gmra.mxu0 %v238
      %v479 = vpop.f32.mrf.mxu0
      %v480 = vadd.f32 0.0, %v479
      %v481 = vpop.f32.mrf.mxu0
      %v482 = vpop.f32.mrf.mxu0
      %v483 = vadd.f32 0.0, %v482
      %v484 = vpop.f32.mrf.mxu0
      %485 = vdwg.mxu0
      %v502 = vunpack.c.l.b16 %v341
      %v503 = vunpack.c.l.b16 %v342
      %v504 = vunpack.c.l.b16 %v343
      %v505 = vunpack.c.l.b16 %v344
      %v506 = vunpack.c.l.b16 %v345
      %v507 = vunpack.c.l.b16 %v346
      %v508 = vunpack.c.l.b16 %v347
      %v509 = vunpack.c.l.b16 %v348
      %v510 = vunpack.c.l.b16 %v349
      %v511 = vunpack.c.l.b16 %v350
      %v512 = vunpack.c.l.b16 %v351
      %v513 = vunpack.c.l.b16 %v352
      %v514 = vunpack.c.l.b16 %v353
      %v515 = vunpack.c.l.b16 %v354
      %v516 = vunpack.c.l.b16 %v355
      %v517 = vunpack.c.l.b16 %v356
      %v518 = vpack.c.b16 %v503, %v502
      %v519 = vpack.c.b16 %v505, %v504
      %v520 = vpack.c.b16 %v507, %v506
      %v521 = vpack.c.b16 %v509, %v508
      %v522 = vpack.c.b16 %v511, %v510
      %v523 = vpack.c.b16 %v513, %v512
      %v524 = vpack.c.b16 %v515, %v514
      %v525 = vpack.c.b16 %v517, %v516
      %534 = vmatprep.subr.bf16.mxu0 0
      %535 = vmatpush1.bf16.msra.mxu0 %v525
      %536 = vmatprep.subr.bf16.mxu0 0
      %537 = vmatpush1.bf16.msra.mxu0 %v524
      %538 = vmatprep.subr.bf16.mxu0 0
      %539 = vmatpush1.bf16.msra.mxu0 %v523
      %540 = vmatprep.subr.bf16.mxu0 0
      %541 = vmatpush1.bf16.msra.mxu0 %v522
      %542 = vmatprep.subr.bf16.mxu0 0
      %543 = vmatpush1.bf16.msra.mxu0 %v521
      %544 = vmatprep.subr.bf16.mxu0 0
      %545 = vmatpush1.bf16.msra.mxu0 %v520
      %546 = vmatprep.subr.bf16.mxu0 0
      %547 = vmatpush1.bf16.msra.mxu0 %v519
      %548 = vmatprep.subr.bf16.mxu0 0
      %549 = vmatpush1.bf16.msra.mxu0 %v518
      %550 = vmatprep.subr.bf16.mxu0 0
      %551 = vmatpush2.bf16.msra.mxu0 0
      %552 = vmatprep.subr.bf16.mxu0 0
      %553 = vmatpush2.bf16.msra.mxu0 0
      %554 = vmatprep.subr.bf16.mxu0 0
      %555 = vmatpush2.bf16.msra.mxu0 0
      %556 = vmatprep.subr.bf16.mxu0 0
      %557 = vmatpush2.bf16.msra.mxu0 0
      %558 = vmatprep.subr.bf16.mxu0 0
      %559 = vmatpush2.bf16.msra.mxu0 0
      %560 = vmatprep.subr.bf16.mxu0 0
      %561 = vmatpush2.bf16.msra.mxu0 0
      %562 = vmatprep.subr.bf16.mxu0 0
      %563 = vmatpush2.bf16.msra.mxu0 0
      %564 = vmatprep.subr.bf16.mxu0 0
      %565 = vmatpush2.bf16.msra.mxu0 0
      %566 = vmatprep.mubr.bf16.mxu0 0
      %567 = vmatmul.mubr.bf16.gmra.mxu0 %v337
      %v568 = vpop.f32.mrf.mxu0
      %v569 = vadd.f32 %v456, %v568
      %v570 = vpop.f32.mrf.mxu0
      %v571 = vpop.f32.mrf.mxu0
      %v572 = vadd.f32 %v459, %v571
      %v573 = vpop.f32.mrf.mxu0
      %574 = vmatprep.mubr.bf16.mxu0 0
      %575 = vmatmul.mubr.bf16.gmra.mxu0 %v338
      %v576 = vpop.f32.mrf.mxu0
      %v577 = vadd.f32 %v464, %v576
      %v578 = vpop.f32.mrf.mxu0
      %v579 = vpop.f32.mrf.mxu0
      %v580 = vadd.f32 %v467, %v579
      %v581 = vpop.f32.mrf.mxu0
      %582 = vmatprep.mubr.bf16.mxu0 0
      %583 = vmatmul.mubr.bf16.gmra.mxu0 %v339
      %v584 = vpop.f32.mrf.mxu0
      %v585 = vadd.f32 %v472, %v584
      %v586 = vpop.f32.mrf.mxu0
      %v587 = vpop.f32.mrf.mxu0
      %v588 = vadd.f32 %v475, %v587
      %v589 = vpop.f32.mrf.mxu0
      %590 = vmatprep.mubr.bf16.mxu0 0
      %591 = vmatmul.mubr.bf16.gmra.mxu0 %v340
      %v592 = vpop.f32.mrf.mxu0
      %v593 = vadd.f32 %v480, %v592
      %v594 = vpop.f32.mrf.mxu0
      %v595 = vpop.f32.mrf.mxu0
      %v596 = vadd.f32 %v483, %v595
      %v597 = vpop.f32.mrf.mxu0
      %598 = vdwg.mxu0
      %v599 = vld [vmem:[%s3] sm:$0x1]
      %v601 = vlaneseq
      %v602 = vshrl.u32 %v601, 7
      %v603 = vsub.s32 0, %v602
      %v604 = vrot.slane %v599, %v603
      %v606 = vadd.f32 %v569, %v604
      %v607 = vadd.f32 %v572, %v604
      %v608 = vadd.f32 %v577, %v604
      %v609 = vadd.f32 %v580, %v604
      %v610 = vadd.f32 %v585, %v604
      %v611 = vadd.f32 %v588, %v604
      %v612 = vadd.f32 %v593, %v604
      %v613 = vadd.f32 %v596, %v604
      %v614 = vmax.f32 %v606, 0.0
      %v615 = vmax.f32 %v607, 0.0
      %v616 = vmax.f32 %v608, 0.0
      %v617 = vmax.f32 %v609, 0.0
      %v618 = vmax.f32 %v610, 0.0
      %v619 = vmax.f32 %v611, 0.0
      %v620 = vmax.f32 %v612, 0.0
      %v621 = vmax.f32 %v613, 0.0
      %v622 = vpack.c.bf16 %v615, %v614
      %v623 = vpack.c.bf16 %v617, %v616
      %v624 = vpack.c.bf16 %v619, %v618
      %v625 = vpack.c.bf16 %v621, %v620
      %626 = vmatprep.subr.bf16.mxu0 0
      %627 = vmatpush1.bf16.msra.mxu0 0
      %628 = vmatprep.subr.bf16.mxu0 0
      %629 = vmatpush1.bf16.msra.mxu0 0
      %630 = vmatprep.subr.bf16.mxu0 0
      %631 = vmatpush1.bf16.msra.mxu0 0
      %632 = vmatprep.subr.bf16.mxu0 0
      %633 = vmatpush1.bf16.msra.mxu0 0
      %634 = vmatprep.subr.bf16.mxu0 0
      %635 = vmatpush1.bf16.msra.mxu0 %v625
      %636 = vmatprep.subr.bf16.mxu0 0
      %637 = vmatpush1.bf16.msra.mxu0 %v624
      %638 = vmatprep.subr.bf16.mxu0 0
      %639 = vmatpush1.bf16.msra.mxu0 %v623
      %640 = vmatprep.subr.bf16.mxu0 0
      %641 = vmatpush1.bf16.msra.mxu0 %v622
      %642 = vmatprep.subr.bf16.mxu0 0
      %643 = vmatpush2.bf16.msra.mxu0 0
      %644 = vmatprep.subr.bf16.mxu0 0
      %645 = vmatpush2.bf16.msra.mxu0 0
      %646 = vmatprep.subr.bf16.mxu0 0
      %647 = vmatpush2.bf16.msra.mxu0 0
      %648 = vmatprep.subr.bf16.mxu0 0
      %649 = vmatpush2.bf16.msra.mxu0 0
      %650 = vmatprep.subr.bf16.mxu0 0
      %651 = vmatpush2.bf16.msra.mxu0 0
      %652 = vmatprep.subr.bf16.mxu0 0
      %653 = vmatpush2.bf16.msra.mxu0 0
      %654 = vmatprep.subr.bf16.mxu0 0
      %655 = vmatpush2.bf16.msra.mxu0 0
      %656 = vmatprep.subr.bf16.mxu0 0
      %657 = vmatpush2.bf16.msra.mxu0 0
      %658 = vmatprep.mubr.bf16.mxu0 0
      %659 = vmatmul.mubr.bf16.gmra.mxu0 %v261
      %v660 = vpop.f32.mrf.mxu0
      %v661 = vadd.f32 0.0, %v660
      %v662 = vpop.f32.mrf.mxu0
      %v663 = vpop.f32.mrf.mxu0
      %v664 = vadd.f32 0.0, %v663
      %v665 = vpop.f32.mrf.mxu0
      %666 = vmatprep.mubr.bf16.mxu0 0
      %667 = vmatmul.mubr.bf16.gmra.mxu0 %v264
      %v668 = vpop.f32.mrf.mxu0
      %v669 = vadd.f32 0.0, %v668
      %v670 = vpop.f32.mrf.mxu0
      %v671 = vpop.f32.mrf.mxu0
      %v672 = vadd.f32 0.0, %v671
      %v673 = vpop.f32.mrf.mxu0
      %674 = vmatprep.mubr.bf16.mxu0 0
      %675 = vmatmul.mubr.bf16.gmra.mxu0 %v267
      %v676 = vpop.f32.mrf.mxu0
      %v677 = vadd.f32 0.0, %v676
      %v678 = vpop.f32.mrf.mxu0
      %v679 = vpop.f32.mrf.mxu0
      %v680 = vadd.f32 0.0, %v679
      %v681 = vpop.f32.mrf.mxu0
      %682 = vmatprep.mubr.bf16.mxu0 0
      %683 = vmatmul.mubr.bf16.gmra.mxu0 %v270
      %v684 = vpop.f32.mrf.mxu0
      %v685 = vadd.f32 0.0, %v684
      %v686 = vpop.f32.mrf.mxu0
      %v687 = vpop.f32.mrf.mxu0
      %v688 = vadd.f32 0.0, %v687
      %v689 = vpop.f32.mrf.mxu0
      %690 = vdwg.mxu0
      %v691 = vpack.c.bf16 %v664, %v661
      %v692 = vpack.c.bf16 %v672, %v669
      %v693 = vpack.c.bf16 %v680, %v677
      %v694 = vpack.c.bf16 %v688, %v685
      %s695 = scalar_lea.vmem %s2, 128
      %v696 = vld [vmem:[%s695] sm:$0xf]
      %v697 = vld [vmem:[%s695 + $0x4] sm:$0xf]
      %v698 = vld [vmem:[%s695 + $0x8] sm:$0xf]
      %v699 = vld [vmem:[%s695 + $0xc] sm:$0xf]
      %v700 = vld [vmem:[%s695 + $0x10] sm:$0xf]
      %v701 = vld [vmem:[%s695 + $0x14] sm:$0xf]
      %v702 = vld [vmem:[%s695 + $0x18] sm:$0xf]
      %v703 = vld [vmem:[%s695 + $0x1c] sm:$0xf]
      %v704 = vld [vmem:[%s695 + $0x20] sm:$0xf]
      %v705 = vld [vmem:[%s695 + $0x24] sm:$0xf]
      %v706 = vld [vmem:[%s695 + $0x28] sm:$0xf]
      %v707 = vld [vmem:[%s695 + $0x2c] sm:$0xf]
      %v708 = vld [vmem:[%s695 + $0x30] sm:$0xf]
      %v709 = vld [vmem:[%s695 + $0x34] sm:$0xf]
      %v710 = vld [vmem:[%s695 + $0x38] sm:$0xf]
      %v711 = vld [vmem:[%s695 + $0x3c] sm:$0xf]
      %v712 = vld [vmem:[%s695 + $0x40] sm:$0xf]
      %v713 = vld [vmem:[%s695 + $0x44] sm:$0xf]
      %v714 = vld [vmem:[%s695 + $0x48] sm:$0xf]
      %v715 = vld [vmem:[%s695 + $0x4c] sm:$0xf]
      %v716 = vld [vmem:[%s695 + $0x50] sm:$0xf]
      %v717 = vld [vmem:[%s695 + $0x54] sm:$0xf]
      %v718 = vld [vmem:[%s695 + $0x58] sm:$0xf]
      %v719 = vld [vmem:[%s695 + $0x5c] sm:$0xf]
      %v720 = vld [vmem:[%s695 + $0x60] sm:$0xf]
      %v721 = vld [vmem:[%s695 + $0x64] sm:$0xf]
      %v722 = vld [vmem:[%s695 + $0x68] sm:$0xf]
      %v723 = vld [vmem:[%s695 + $0x6c] sm:$0xf]
      %v724 = vld [vmem:[%s695 + $0x70] sm:$0xf]
      %v725 = vld [vmem:[%s695 + $0x74] sm:$0xf]
      %v726 = vld [vmem:[%s695 + $0x78] sm:$0xf]
      %v727 = vld [vmem:[%s695 + $0x7c] sm:$0xf]
      %v744 = vunpack.c.l.b16 %v712
      %v745 = vunpack.c.l.b16 %v713
      %v746 = vunpack.c.l.b16 %v714
      %v747 = vunpack.c.l.b16 %v715
      %v748 = vunpack.c.l.b16 %v716
      %v749 = vunpack.c.l.b16 %v717
      %v750 = vunpack.c.l.b16 %v718
      %v751 = vunpack.c.l.b16 %v719
      %v752 = vunpack.c.l.b16 %v720
      %v753 = vunpack.c.l.b16 %v721
      %v754 = vunpack.c.l.b16 %v722
      %v755 = vunpack.c.l.b16 %v723
      %v756 = vunpack.c.l.b16 %v724
      %v757 = vunpack.c.l.b16 %v725
      %v758 = vunpack.c.l.b16 %v726
      %v759 = vunpack.c.l.b16 %v727
      %v760 = vpack.c.b16 %v745, %v744
      %v761 = vpack.c.b16 %v747, %v746
      %v762 = vpack.c.b16 %v749, %v748
      %v763 = vpack.c.b16 %v751, %v750
      %v764 = vpack.c.b16 %v753, %v752
      %v765 = vpack.c.b16 %v755, %v754
      %v766 = vpack.c.b16 %v757, %v756
      %v767 = vpack.c.b16 %v759, %v758
      %776 = vmatprep.subr.bf16.mxu0 0
      %777 = vmatpush1.bf16.msra.mxu0 %v767
      %778 = vmatprep.subr.bf16.mxu0 0
      %779 = vmatpush1.bf16.msra.mxu0 %v766
      %780 = vmatprep.subr.bf16.mxu0 0
      %781 = vmatpush1.bf16.msra.mxu0 %v765
      %782 = vmatprep.subr.bf16.mxu0 0
      %783 = vmatpush1.bf16.msra.mxu0 %v764
      %784 = vmatprep.subr.bf16.mxu0 0
      %785 = vmatpush1.bf16.msra.mxu0 %v763
      %786 = vmatprep.subr.bf16.mxu0 0
      %787 = vmatpush1.bf16.msra.mxu0 %v762
      %788 = vmatprep.subr.bf16.mxu0 0
      %789 = vmatpush1.bf16.msra.mxu0 %v761
      %790 = vmatprep.subr.bf16.mxu0 0
      %791 = vmatpush1.bf16.msra.mxu0 %v760
      %792 = vmatprep.subr.bf16.mxu0 0
      %793 = vmatpush2.bf16.msra.mxu0 0
      %794 = vmatprep.subr.bf16.mxu0 0
      %795 = vmatpush2.bf16.msra.mxu0 0
      %796 = vmatprep.subr.bf16.mxu0 0
      %797 = vmatpush2.bf16.msra.mxu0 0
      %798 = vmatprep.subr.bf16.mxu0 0
      %799 = vmatpush2.bf16.msra.mxu0 0
      %800 = vmatprep.subr.bf16.mxu0 0
      %801 = vmatpush2.bf16.msra.mxu0 0
      %802 = vmatprep.subr.bf16.mxu0 0
      %803 = vmatpush2.bf16.msra.mxu0 0
      %804 = vmatprep.subr.bf16.mxu0 0
      %805 = vmatpush2.bf16.msra.mxu0 0
      %806 = vmatprep.subr.bf16.mxu0 0
      %807 = vmatpush2.bf16.msra.mxu0 0
      %808 = vmatprep.mubr.bf16.mxu0 0
      %809 = vmatmul.mubr.bf16.gmra.mxu0 %v622
      %v810 = vpop.f32.mrf.mxu0
      %v811 = vadd.f32 0.0, %v810
      %v812 = vpop.f32.mrf.mxu0
      %v813 = vpop.f32.mrf.mxu0
      %v814 = vadd.f32 0.0, %v813
      %v815 = vpop.f32.mrf.mxu0
      %816 = vmatprep.mubr.bf16.mxu0 0
      %817 = vmatmul.mubr.bf16.gmra.mxu0 %v623
      %v818 = vpop.f32.mrf.mxu0
      %v819 = vadd.f32 0.0, %v818
      %v820 = vpop.f32.mrf.mxu0
      %v821 = vpop.f32.mrf.mxu0
      %v822 = vadd.f32 0.0, %v821
      %v823 = vpop.f32.mrf.mxu0
      %824 = vmatprep.mubr.bf16.mxu0 0
      %825 = vmatmul.mubr.bf16.gmra.mxu0 %v624
      %v826 = vpop.f32.mrf.mxu0
      %v827 = vadd.f32 0.0, %v826
      %v828 = vpop.f32.mrf.mxu0
      %v829 = vpop.f32.mrf.mxu0
      %v830 = vadd.f32 0.0, %v829
      %v831 = vpop.f32.mrf.mxu0
      %832 = vmatprep.mubr.bf16.mxu0 0
      %833 = vmatmul.mubr.bf16.gmra.mxu0 %v625
      %v834 = vpop.f32.mrf.mxu0
      %v835 = vadd.f32 0.0, %v834
      %v836 = vpop.f32.mrf.mxu0
      %v837 = vpop.f32.mrf.mxu0
      %v838 = vadd.f32 0.0, %v837
      %v839 = vpop.f32.mrf.mxu0
      %840 = vdwg.mxu0
      %v857 = vunpack.c.l.b16 %v696
      %v858 = vunpack.c.l.b16 %v697
      %v859 = vunpack.c.l.b16 %v698
      %v860 = vunpack.c.l.b16 %v699
      %v861 = vunpack.c.l.b16 %v700
      %v862 = vunpack.c.l.b16 %v701
      %v863 = vunpack.c.l.b16 %v702
      %v864 = vunpack.c.l.b16 %v703
      %v865 = vunpack.c.l.b16 %v704
      %v866 = vunpack.c.l.b16 %v705
      %v867 = vunpack.c.l.b16 %v706
      %v868 = vunpack.c.l.b16 %v707
      %v869 = vunpack.c.l.b16 %v708
      %v870 = vunpack.c.l.b16 %v709
      %v871 = vunpack.c.l.b16 %v710
      %v872 = vunpack.c.l.b16 %v711
      %v873 = vpack.c.b16 %v858, %v857
      %v874 = vpack.c.b16 %v860, %v859
      %v875 = vpack.c.b16 %v862, %v861
      %v876 = vpack.c.b16 %v864, %v863
      %v877 = vpack.c.b16 %v866, %v865
      %v878 = vpack.c.b16 %v868, %v867
      %v879 = vpack.c.b16 %v870, %v869
      %v880 = vpack.c.b16 %v872, %v871
      %889 = vmatprep.subr.bf16.mxu0 0
      %890 = vmatpush1.bf16.msra.mxu0 %v880
      %891 = vmatprep.subr.bf16.mxu0 0
      %892 = vmatpush1.bf16.msra.mxu0 %v879
      %893 = vmatprep.subr.bf16.mxu0 0
      %894 = vmatpush1.bf16.msra.mxu0 %v878
      %895 = vmatprep.subr.bf16.mxu0 0
      %896 = vmatpush1.bf16.msra.mxu0 %v877
      %897 = vmatprep.subr.bf16.mxu0 0
      %898 = vmatpush1.bf16.msra.mxu0 %v876
      %899 = vmatprep.subr.bf16.mxu0 0
      %900 = vmatpush1.bf16.msra.mxu0 %v875
      %901 = vmatprep.subr.bf16.mxu0 0
      %902 = vmatpush1.bf16.msra.mxu0 %v874
      %903 = vmatprep.subr.bf16.mxu0 0
      %904 = vmatpush1.bf16.msra.mxu0 %v873
      %905 = vmatprep.subr.bf16.mxu0 0
      %906 = vmatpush2.bf16.msra.mxu0 0
      %907 = vmatprep.subr.bf16.mxu0 0
      %908 = vmatpush2.bf16.msra.mxu0 0
      %909 = vmatprep.subr.bf16.mxu0 0
      %910 = vmatpush2.bf16.msra.mxu0 0
      %911 = vmatprep.subr.bf16.mxu0 0
      %912 = vmatpush2.bf16.msra.mxu0 0
      %913 = vmatprep.subr.bf16.mxu0 0
      %914 = vmatpush2.bf16.msra.mxu0 0
      %915 = vmatprep.subr.bf16.mxu0 0
      %916 = vmatpush2.bf16.msra.mxu0 0
      %917 = vmatprep.subr.bf16.mxu0 0
      %918 = vmatpush2.bf16.msra.mxu0 0
      %919 = vmatprep.subr.bf16.mxu0 0
      %920 = vmatpush2.bf16.msra.mxu0 0
      %921 = vmatprep.mubr.bf16.mxu0 0
      %922 = vmatmul.mubr.bf16.gmra.mxu0 %v691
      %v923 = vpop.f32.mrf.mxu0
      %v924 = vadd.f32 %v811, %v923
      %v925 = vpop.f32.mrf.mxu0
      %v926 = vpop.f32.mrf.mxu0
      %v927 = vadd.f32 %v814, %v926
      %v928 = vpop.f32.mrf.mxu0
      %929 = vmatprep.mubr.bf16.mxu0 0
      %930 = vmatmul.mubr.bf16.gmra.mxu0 %v692
      %v931 = vpop.f32.mrf.mxu0
      %v932 = vadd.f32 %v819, %v931
      %v933 = vpop.f32.mrf.mxu0
      %v934 = vpop.f32.mrf.mxu0
      %v935 = vadd.f32 %v822, %v934
      %v936 = vpop.f32.mrf.mxu0
      %937 = vmatprep.mubr.bf16.mxu0 0
      %938 = vmatmul.mubr.bf16.gmra.mxu0 %v693
      %v939 = vpop.f32.mrf.mxu0
      %v940 = vadd.f32 %v827, %v939
      %v941 = vpop.f32.mrf.mxu0
      %v942 = vpop.f32.mrf.mxu0
      %v943 = vadd.f32 %v830, %v942
      %v944 = vpop.f32.mrf.mxu0
      %945 = vmatprep.mubr.bf16.mxu0 0
      %946 = vmatmul.mubr.bf16.gmra.mxu0 %v694
      %v947 = vpop.f32.mrf.mxu0
      %v948 = vadd.f32 %v835, %v947
      %v949 = vpop.f32.mrf.mxu0
      %v950 = vpop.f32.mrf.mxu0
      %v951 = vadd.f32 %v838, %v950
      %v952 = vpop.f32.mrf.mxu0
      %953 = vdwg.mxu0
      %s954 = scalar_lea.vmem %s3, 1
      %v955 = vld [vmem:[%s954] sm:$0x1]
      %v957 = vlaneseq
      %v958 = vshrl.u32 %v957, 7
      %v959 = vsub.s32 0, %v958
      %v960 = vrot.slane %v955, %v959
      %v962 = vadd.f32 %v924, %v960
      %v963 = vadd.f32 %v927, %v960
      %v964 = vadd.f32 %v932, %v960
      %v965 = vadd.f32 %v935, %v960
      %v966 = vadd.f32 %v940, %v960
      %v967 = vadd.f32 %v943, %v960
      %v968 = vadd.f32 %v948, %v960
      %v969 = vadd.f32 %v951, %v960
      %v970 = vmax.f32 %v962, 0.0
      %v971 = vmax.f32 %v963, 0.0
      %v972 = vmax.f32 %v964, 0.0
      %v973 = vmax.f32 %v965, 0.0
      %v974 = vmax.f32 %v966, 0.0
      %v975 = vmax.f32 %v967, 0.0
      %v976 = vmax.f32 %v968, 0.0
      %v977 = vmax.f32 %v969, 0.0
      %v978 = vpack.c.bf16 %v971, %v970
      %v979 = vpack.c.bf16 %v973, %v972
      %v980 = vpack.c.bf16 %v975, %v974
      %v981 = vpack.c.bf16 %v977, %v976
      %982 = vmatprep.subr.bf16.mxu0 0
      %983 = vmatpush1.bf16.msra.mxu0 0
      %984 = vmatprep.subr.bf16.mxu0 0
      %985 = vmatpush1.bf16.msra.mxu0 0
      %986 = vmatprep.subr.bf16.mxu0 0
      %987 = vmatpush1.bf16.msra.mxu0 0
      %988 = vmatprep.subr.bf16.mxu0 0
      %989 = vmatpush1.bf16.msra.mxu0 0
      %990 = vmatprep.subr.bf16.mxu0 0
      %991 = vmatpush1.bf16.msra.mxu0 %v981
      %992 = vmatprep.subr.bf16.mxu0 0
      %993 = vmatpush1.bf16.msra.mxu0 %v980
      %994 = vmatprep.subr.bf16.mxu0 0
      %995 = vmatpush1.bf16.msra.mxu0 %v979
      %996 = vmatprep.subr.bf16.mxu0 0
      %997 = vmatpush1.bf16.msra.mxu0 %v978
      %998 = vmatprep.subr.bf16.mxu0 0
      %999 = vmatpush2.bf16.msra.mxu0 0
      %1000 = vmatprep.subr.bf16.mxu0 0
      %1001 = vmatpush2.bf16.msra.mxu0 0
      %1002 = vmatprep.subr.bf16.mxu0 0
      %1003 = vmatpush2.bf16.msra.mxu0 0
      %1004 = vmatprep.subr.bf16.mxu0 0
      %1005 = vmatpush2.bf16.msra.mxu0 0
      %1006 = vmatprep.subr.bf16.mxu0 0
      %1007 = vmatpush2.bf16.msra.mxu0 0
      %1008 = vmatprep.subr.bf16.mxu0 0
      %1009 = vmatpush2.bf16.msra.mxu0 0
      %1010 = vmatprep.subr.bf16.mxu0 0
      %1011 = vmatpush2.bf16.msra.mxu0 0
      %1012 = vmatprep.subr.bf16.mxu0 0
      %1013 = vmatpush2.bf16.msra.mxu0 0
      %1014 = vmatprep.mubr.bf16.mxu0 0
      %1015 = vmatmul.mubr.bf16.gmra.mxu0 %v261
      %v1016 = vpop.f32.mrf.mxu0
      %v1017 = vadd.f32 0.0, %v1016
      %v1018 = vpop.f32.mrf.mxu0
      %v1019 = vpop.f32.mrf.mxu0
      %v1020 = vadd.f32 0.0, %v1019
      %v1021 = vpop.f32.mrf.mxu0
      %1022 = vmatprep.mubr.bf16.mxu0 0
      %1023 = vmatmul.mubr.bf16.gmra.mxu0 %v264
      %v1024 = vpop.f32.mrf.mxu0
      %v1025 = vadd.f32 0.0, %v1024
      %v1026 = vpop.f32.mrf.mxu0
      %v1027 = vpop.f32.mrf.mxu0
      %v1028 = vadd.f32 0.0, %v1027
      %v1029 = vpop.f32.mrf.mxu0
      %1030 = vmatprep.mubr.bf16.mxu0 0
      %1031 = vmatmul.mubr.bf16.gmra.mxu0 %v267
      %v1032 = vpop.f32.mrf.mxu0
      %v1033 = vadd.f32 0.0, %v1032
      %v1034 = vpop.f32.mrf.mxu0
      %v1035 = vpop.f32.mrf.mxu0
      %v1036 = vadd.f32 0.0, %v1035
      %v1037 = vpop.f32.mrf.mxu0
      %1038 = vmatprep.mubr.bf16.mxu0 0
      %1039 = vmatmul.mubr.bf16.gmra.mxu0 %v270
      %v1040 = vpop.f32.mrf.mxu0
      %v1041 = vadd.f32 0.0, %v1040
      %v1042 = vpop.f32.mrf.mxu0
      %v1043 = vpop.f32.mrf.mxu0
      %v1044 = vadd.f32 0.0, %v1043
      %v1045 = vpop.f32.mrf.mxu0
      %1046 = vdwg.mxu0
      %v1047 = vpack.c.bf16 %v1020, %v1017
      %v1048 = vpack.c.bf16 %v1028, %v1025
      %v1049 = vpack.c.bf16 %v1036, %v1033
      %v1050 = vpack.c.bf16 %v1044, %v1041
      %s1051 = scalar_lea.vmem %s2, 256
      %v1052 = vld [vmem:[%s1051] sm:$0xf]
      %v1053 = vld [vmem:[%s1051 + $0x4] sm:$0xf]
      %v1054 = vld [vmem:[%s1051 + $0x8] sm:$0xf]
      %v1055 = vld [vmem:[%s1051 + $0xc] sm:$0xf]
      %v1056 = vld [vmem:[%s1051 + $0x10] sm:$0xf]
      %v1057 = vld [vmem:[%s1051 + $0x14] sm:$0xf]
      %v1058 = vld [vmem:[%s1051 + $0x18] sm:$0xf]
      %v1059 = vld [vmem:[%s1051 + $0x1c] sm:$0xf]
      %v1060 = vld [vmem:[%s1051 + $0x20] sm:$0xf]
      %v1061 = vld [vmem:[%s1051 + $0x24] sm:$0xf]
      %v1062 = vld [vmem:[%s1051 + $0x28] sm:$0xf]
      %v1063 = vld [vmem:[%s1051 + $0x2c] sm:$0xf]
      %v1064 = vld [vmem:[%s1051 + $0x30] sm:$0xf]
      %v1065 = vld [vmem:[%s1051 + $0x34] sm:$0xf]
      %v1066 = vld [vmem:[%s1051 + $0x38] sm:$0xf]
      %v1067 = vld [vmem:[%s1051 + $0x3c] sm:$0xf]
      %v1068 = vld [vmem:[%s1051 + $0x40] sm:$0xf]
      %v1069 = vld [vmem:[%s1051 + $0x44] sm:$0xf]
      %v1070 = vld [vmem:[%s1051 + $0x48] sm:$0xf]
      %v1071 = vld [vmem:[%s1051 + $0x4c] sm:$0xf]
      %v1072 = vld [vmem:[%s1051 + $0x50] sm:$0xf]
      %v1073 = vld [vmem:[%s1051 + $0x54] sm:$0xf]
      %v1074 = vld [vmem:[%s1051 + $0x58] sm:$0xf]
      %v1075 = vld [vmem:[%s1051 + $0x5c] sm:$0xf]
      %v1076 = vld [vmem:[%s1051 + $0x60] sm:$0xf]
      %v1077 = vld [vmem:[%s1051 + $0x64] sm:$0xf]
      %v1078 = vld [vmem:[%s1051 + $0x68] sm:$0xf]
      %v1079 = vld [vmem:[%s1051 + $0x6c] sm:$0xf]
      %v1080 = vld [vmem:[%s1051 + $0x70] sm:$0xf]
      %v1081 = vld [vmem:[%s1051 + $0x74] sm:$0xf]
      %v1082 = vld [vmem:[%s1051 + $0x78] sm:$0xf]
      %v1083 = vld [vmem:[%s1051 + $0x7c] sm:$0xf]
      %v1100 = vunpack.c.l.b16 %v1068
      %v1101 = vunpack.c.l.b16 %v1069
      %v1102 = vunpack.c.l.b16 %v1070
      %v1103 = vunpack.c.l.b16 %v1071
      %v1104 = vunpack.c.l.b16 %v1072
      %v1105 = vunpack.c.l.b16 %v1073
      %v1106 = vunpack.c.l.b16 %v1074
      %v1107 = vunpack.c.l.b16 %v1075
      %v1108 = vunpack.c.l.b16 %v1076
      %v1109 = vunpack.c.l.b16 %v1077
      %v1110 = vunpack.c.l.b16 %v1078
      %v1111 = vunpack.c.l.b16 %v1079
      %v1112 = vunpack.c.l.b16 %v1080
      %v1113 = vunpack.c.l.b16 %v1081
      %v1114 = vunpack.c.l.b16 %v1082
      %v1115 = vunpack.c.l.b16 %v1083
      %v1116 = vpack.c.b16 %v1101, %v1100
      %v1117 = vpack.c.b16 %v1103, %v1102
      %v1118 = vpack.c.b16 %v1105, %v1104
      %v1119 = vpack.c.b16 %v1107, %v1106
      %v1120 = vpack.c.b16 %v1109, %v1108
      %v1121 = vpack.c.b16 %v1111, %v1110
      %v1122 = vpack.c.b16 %v1113, %v1112
      %v1123 = vpack.c.b16 %v1115, %v1114
      %1132 = vmatprep.subr.bf16.mxu0 0
      %1133 = vmatpush1.bf16.msra.mxu0 %v1123
      %1134 = vmatprep.subr.bf16.mxu0 0
      %1135 = vmatpush1.bf16.msra.mxu0 %v1122
      %1136 = vmatprep.subr.bf16.mxu0 0
      %1137 = vmatpush1.bf16.msra.mxu0 %v1121
      %1138 = vmatprep.subr.bf16.mxu0 0
      %1139 = vmatpush1.bf16.msra.mxu0 %v1120
      %1140 = vmatprep.subr.bf16.mxu0 0
      %1141 = vmatpush1.bf16.msra.mxu0 %v1119
      %1142 = vmatprep.subr.bf16.mxu0 0
      %1143 = vmatpush1.bf16.msra.mxu0 %v1118
      %1144 = vmatprep.subr.bf16.mxu0 0
      %1145 = vmatpush1.bf16.msra.mxu0 %v1117
      %1146 = vmatprep.subr.bf16.mxu0 0
      %1147 = vmatpush1.bf16.msra.mxu0 %v1116
      %1148 = vmatprep.subr.bf16.mxu0 0
      %1149 = vmatpush2.bf16.msra.mxu0 0
      %1150 = vmatprep.subr.bf16.mxu0 0
      %1151 = vmatpush2.bf16.msra.mxu0 0
      %1152 = vmatprep.subr.bf16.mxu0 0
      %1153 = vmatpush2.bf16.msra.mxu0 0
      %1154 = vmatprep.subr.bf16.mxu0 0
      %1155 = vmatpush2.bf16.msra.mxu0 0
      %1156 = vmatprep.subr.bf16.mxu0 0
      %1157 = vmatpush2.bf16.msra.mxu0 0
      %1158 = vmatprep.subr.bf16.mxu0 0
      %1159 = vmatpush2.bf16.msra.mxu0 0
      %1160 = vmatprep.subr.bf16.mxu0 0
      %1161 = vmatpush2.bf16.msra.mxu0 0
      %1162 = vmatprep.subr.bf16.mxu0 0
      %1163 = vmatpush2.bf16.msra.mxu0 0
      %1164 = vmatprep.mubr.bf16.mxu0 0
      %1165 = vmatmul.mubr.bf16.gmra.mxu0 %v978
      %v1166 = vpop.f32.mrf.mxu0
      %v1167 = vadd.f32 0.0, %v1166
      %v1168 = vpop.f32.mrf.mxu0
      %v1169 = vpop.f32.mrf.mxu0
      %v1170 = vadd.f32 0.0, %v1169
      %v1171 = vpop.f32.mrf.mxu0
      %1172 = vmatprep.mubr.bf16.mxu0 0
      %1173 = vmatmul.mubr.bf16.gmra.mxu0 %v979
      %v1174 = vpop.f32.mrf.mxu0
      %v1175 = vadd.f32 0.0, %v1174
      %v1176 = vpop.f32.mrf.mxu0
      %v1177 = vpop.f32.mrf.mxu0
      %v1178 = vadd.f32 0.0, %v1177
      %v1179 = vpop.f32.mrf.mxu0
      %1180 = vmatprep.mubr.bf16.mxu0 0
      %1181 = vmatmul.mubr.bf16.gmra.mxu0 %v980
      %v1182 = vpop.f32.mrf.mxu0
      %v1183 = vadd.f32 0.0, %v1182
      %v1184 = vpop.f32.mrf.mxu0
      %v1185 = vpop.f32.mrf.mxu0
      %v1186 = vadd.f32 0.0, %v1185
      %v1187 = vpop.f32.mrf.mxu0
      %1188 = vmatprep.mubr.bf16.mxu0 0
      %1189 = vmatmul.mubr.bf16.gmra.mxu0 %v981
      %v1190 = vpop.f32.mrf.mxu0
      %v1191 = vadd.f32 0.0, %v1190
      %v1192 = vpop.f32.mrf.mxu0
      %v1193 = vpop.f32.mrf.mxu0
      %v1194 = vadd.f32 0.0, %v1193
      %v1195 = vpop.f32.mrf.mxu0
      %1196 = vdwg.mxu0
      %v1213 = vunpack.c.l.b16 %v1052
      %v1214 = vunpack.c.l.b16 %v1053
      %v1215 = vunpack.c.l.b16 %v1054
      %v1216 = vunpack.c.l.b16 %v1055
      %v1217 = vunpack.c.l.b16 %v1056
      %v1218 = vunpack.c.l.b16 %v1057
      %v1219 = vunpack.c.l.b16 %v1058
      %v1220 = vunpack.c.l.b16 %v1059
      %v1221 = vunpack.c.l.b16 %v1060
      %v1222 = vunpack.c.l.b16 %v1061
      %v1223 = vunpack.c.l.b16 %v1062
      %v1224 = vunpack.c.l.b16 %v1063
      %v1225 = vunpack.c.l.b16 %v1064
      %v1226 = vunpack.c.l.b16 %v1065
      %v1227 = vunpack.c.l.b16 %v1066
      %v1228 = vunpack.c.l.b16 %v1067
      %v1229 = vpack.c.b16 %v1214, %v1213
      %v1230 = vpack.c.b16 %v1216, %v1215
      %v1231 = vpack.c.b16 %v1218, %v1217
      %v1232 = vpack.c.b16 %v1220, %v1219
      %v1233 = vpack.c.b16 %v1222, %v1221
      %v1234 = vpack.c.b16 %v1224, %v1223
      %v1235 = vpack.c.b16 %v1226, %v1225
      %v1236 = vpack.c.b16 %v1228, %v1227
      %1245 = vmatprep.subr.bf16.mxu0 0
      %1246 = vmatpush1.bf16.msra.mxu0 %v1236
      %1247 = vmatprep.subr.bf16.mxu0 0
      %1248 = vmatpush1.bf16.msra.mxu0 %v1235
      %1249 = vmatprep.subr.bf16.mxu0 0
      %1250 = vmatpush1.bf16.msra.mxu0 %v1234
      %1251 = vmatprep.subr.bf16.mxu0 0
      %1252 = vmatpush1.bf16.msra.mxu0 %v1233
      %1253 = vmatprep.subr.bf16.mxu0 0
      %1254 = vmatpush1.bf16.msra.mxu0 %v1232
      %1255 = vmatprep.subr.bf16.mxu0 0
      %1256 = vmatpush1.bf16.msra.mxu0 %v1231
      %1257 = vmatprep.subr.bf16.mxu0 0
      %1258 = vmatpush1.bf16.msra.mxu0 %v1230
      %1259 = vmatprep.subr.bf16.mxu0 0
      %1260 = vmatpush1.bf16.msra.mxu0 %v1229
      %1261 = vmatprep.subr.bf16.mxu0 0
      %1262 = vmatpush2.bf16.msra.mxu0 0
      %1263 = vmatprep.subr.bf16.mxu0 0
      %1264 = vmatpush2.bf16.msra.mxu0 0
      %1265 = vmatprep.subr.bf16.mxu0 0
      %1266 = vmatpush2.bf16.msra.mxu0 0
      %1267 = vmatprep.subr.bf16.mxu0 0
      %1268 = vmatpush2.bf16.msra.mxu0 0
      %1269 = vmatprep.subr.bf16.mxu0 0
      %1270 = vmatpush2.bf16.msra.mxu0 0
      %1271 = vmatprep.subr.bf16.mxu0 0
      %1272 = vmatpush2.bf16.msra.mxu0 0
      %1273 = vmatprep.subr.bf16.mxu0 0
      %1274 = vmatpush2.bf16.msra.mxu0 0
      %1275 = vmatprep.subr.bf16.mxu0 0
      %1276 = vmatpush2.bf16.msra.mxu0 0
      %1277 = vmatprep.mubr.bf16.mxu0 0
      %1278 = vmatmul.mubr.bf16.gmra.mxu0 %v1047
      %v1279 = vpop.f32.mrf.mxu0
      %v1280 = vadd.f32 %v1167, %v1279
      %v1281 = vpop.f32.mrf.mxu0
      %v1282 = vpop.f32.mrf.mxu0
      %v1283 = vadd.f32 %v1170, %v1282
      %v1284 = vpop.f32.mrf.mxu0
      %1285 = vmatprep.mubr.bf16.mxu0 0
      %1286 = vmatmul.mubr.bf16.gmra.mxu0 %v1048
      %v1287 = vpop.f32.mrf.mxu0
      %v1288 = vadd.f32 %v1175, %v1287
      %v1289 = vpop.f32.mrf.mxu0
      %v1290 = vpop.f32.mrf.mxu0
      %v1291 = vadd.f32 %v1178, %v1290
      %v1292 = vpop.f32.mrf.mxu0
      %1293 = vmatprep.mubr.bf16.mxu0 0
      %1294 = vmatmul.mubr.bf16.gmra.mxu0 %v1049
      %v1295 = vpop.f32.mrf.mxu0
      %v1296 = vadd.f32 %v1183, %v1295
      %v1297 = vpop.f32.mrf.mxu0
      %v1298 = vpop.f32.mrf.mxu0
      %v1299 = vadd.f32 %v1186, %v1298
      %v1300 = vpop.f32.mrf.mxu0
      %1301 = vmatprep.mubr.bf16.mxu0 0
      %1302 = vmatmul.mubr.bf16.gmra.mxu0 %v1050
      %v1303 = vpop.f32.mrf.mxu0
      %v1304 = vadd.f32 %v1191, %v1303
      %v1305 = vpop.f32.mrf.mxu0
      %v1306 = vpop.f32.mrf.mxu0
      %v1307 = vadd.f32 %v1194, %v1306
      %v1308 = vpop.f32.mrf.mxu0
      %1309 = vdwg.mxu0
      %s1310 = scalar_lea.vmem %s3, 2
      %v1311 = vld [vmem:[%s1310] sm:$0x1]
      %v1313 = vlaneseq
      %v1314 = vshrl.u32 %v1313, 7
      %v1315 = vsub.s32 0, %v1314
      %v1316 = vrot.slane %v1311, %v1315
      %v1318 = vadd.f32 %v1280, %v1316
      %v1319 = vadd.f32 %v1283, %v1316
      %v1320 = vadd.f32 %v1288, %v1316
      %v1321 = vadd.f32 %v1291, %v1316
      %v1322 = vadd.f32 %v1296, %v1316
      %v1323 = vadd.f32 %v1299, %v1316
      %v1324 = vadd.f32 %v1304, %v1316
      %v1325 = vadd.f32 %v1307, %v1316
      %v1326 = vmax.f32 %v1318, 0.0
      %v1327 = vmax.f32 %v1319, 0.0
      %v1328 = vmax.f32 %v1320, 0.0
      %v1329 = vmax.f32 %v1321, 0.0
      %v1330 = vmax.f32 %v1322, 0.0
      %v1331 = vmax.f32 %v1323, 0.0
      %v1332 = vmax.f32 %v1324, 0.0
      %v1333 = vmax.f32 %v1325, 0.0
      %v1334 = vpack.c.bf16 %v1327, %v1326
      %v1335 = vpack.c.bf16 %v1329, %v1328
      %v1336 = vpack.c.bf16 %v1331, %v1330
      %v1337 = vpack.c.bf16 %v1333, %v1332
      %1338 = vmatprep.subr.bf16.mxu0 0
      %1339 = vmatpush1.bf16.msra.mxu0 0
      %1340 = vmatprep.subr.bf16.mxu0 0
      %1341 = vmatpush1.bf16.msra.mxu0 0
      %1342 = vmatprep.subr.bf16.mxu0 0
      %1343 = vmatpush1.bf16.msra.mxu0 0
      %1344 = vmatprep.subr.bf16.mxu0 0
      %1345 = vmatpush1.bf16.msra.mxu0 0
      %1346 = vmatprep.subr.bf16.mxu0 0
      %1347 = vmatpush1.bf16.msra.mxu0 %v1337
      %1348 = vmatprep.subr.bf16.mxu0 0
      %1349 = vmatpush1.bf16.msra.mxu0 %v1336
      %1350 = vmatprep.subr.bf16.mxu0 0
      %1351 = vmatpush1.bf16.msra.mxu0 %v1335
      %1352 = vmatprep.subr.bf16.mxu0 0
      %1353 = vmatpush1.bf16.msra.mxu0 %v1334
      %1354 = vmatprep.subr.bf16.mxu0 0
      %1355 = vmatpush2.bf16.msra.mxu0 0
      %1356 = vmatprep.subr.bf16.mxu0 0
      %1357 = vmatpush2.bf16.msra.mxu0 0
      %1358 = vmatprep.subr.bf16.mxu0 0
      %1359 = vmatpush2.bf16.msra.mxu0 0
      %1360 = vmatprep.subr.bf16.mxu0 0
      %1361 = vmatpush2.bf16.msra.mxu0 0
      %1362 = vmatprep.subr.bf16.mxu0 0
      %1363 = vmatpush2.bf16.msra.mxu0 0
      %1364 = vmatprep.subr.bf16.mxu0 0
      %1365 = vmatpush2.bf16.msra.mxu0 0
      %1366 = vmatprep.subr.bf16.mxu0 0
      %1367 = vmatpush2.bf16.msra.mxu0 0
      %1368 = vmatprep.subr.bf16.mxu0 0
      %1369 = vmatpush2.bf16.msra.mxu0 0
      %1370 = vmatprep.mubr.bf16.mxu0 0
      %1371 = vmatmul.mubr.bf16.gmra.mxu0 %v261
      %v1372 = vpop.f32.mrf.mxu0
      %v1373 = vadd.f32 0.0, %v1372
      %v1374 = vpop.f32.mrf.mxu0
      %v1375 = vpop.f32.mrf.mxu0
      %v1376 = vadd.f32 0.0, %v1375
      %v1377 = vpop.f32.mrf.mxu0
      %1378 = vmatprep.mubr.bf16.mxu0 0
      %1379 = vmatmul.mubr.bf16.gmra.mxu0 %v264
      %v1380 = vpop.f32.mrf.mxu0
      %v1381 = vadd.f32 0.0, %v1380
      %v1382 = vpop.f32.mrf.mxu0
      %v1383 = vpop.f32.mrf.mxu0
      %v1384 = vadd.f32 0.0, %v1383
      %v1385 = vpop.f32.mrf.mxu0
      %1386 = vmatprep.mubr.bf16.mxu0 0
      %1387 = vmatmul.mubr.bf16.gmra.mxu0 %v267
      %v1388 = vpop.f32.mrf.mxu0
      %v1389 = vadd.f32 0.0, %v1388
      %v1390 = vpop.f32.mrf.mxu0
      %v1391 = vpop.f32.mrf.mxu0
      %v1392 = vadd.f32 0.0, %v1391
      %v1393 = vpop.f32.mrf.mxu0
      %1394 = vmatprep.mubr.bf16.mxu0 0
      %1395 = vmatmul.mubr.bf16.gmra.mxu0 %v270
      %v1396 = vpop.f32.mrf.mxu0
      %v1397 = vadd.f32 0.0, %v1396
      %v1398 = vpop.f32.mrf.mxu0
      %v1399 = vpop.f32.mrf.mxu0
      %v1400 = vadd.f32 0.0, %v1399
      %v1401 = vpop.f32.mrf.mxu0
      %1402 = vdwg.mxu0
      %v1403 = vpack.c.bf16 %v1376, %v1373
      %v1404 = vpack.c.bf16 %v1384, %v1381
      %v1405 = vpack.c.bf16 %v1392, %v1389
      %v1406 = vpack.c.bf16 %v1400, %v1397
      %s1407 = scalar_lea.vmem %s2, 384
      %v1408 = vld [vmem:[%s1407] sm:$0xf]
      %v1409 = vld [vmem:[%s1407 + $0x4] sm:$0xf]
      %v1410 = vld [vmem:[%s1407 + $0x8] sm:$0xf]
      %v1411 = vld [vmem:[%s1407 + $0xc] sm:$0xf]
      %v1412 = vld [vmem:[%s1407 + $0x10] sm:$0xf]
      %v1413 = vld [vmem:[%s1407 + $0x14] sm:$0xf]
      %v1414 = vld [vmem:[%s1407 + $0x18] sm:$0xf]
      %v1415 = vld [vmem:[%s1407 + $0x1c] sm:$0xf]
      %v1416 = vld [vmem:[%s1407 + $0x20] sm:$0xf]
      %v1417 = vld [vmem:[%s1407 + $0x24] sm:$0xf]
      %v1418 = vld [vmem:[%s1407 + $0x28] sm:$0xf]
      %v1419 = vld [vmem:[%s1407 + $0x2c] sm:$0xf]
      %v1420 = vld [vmem:[%s1407 + $0x30] sm:$0xf]
      %v1421 = vld [vmem:[%s1407 + $0x34] sm:$0xf]
      %v1422 = vld [vmem:[%s1407 + $0x38] sm:$0xf]
      %v1423 = vld [vmem:[%s1407 + $0x3c] sm:$0xf]
      %v1424 = vld [vmem:[%s1407 + $0x40] sm:$0xf]
      %v1425 = vld [vmem:[%s1407 + $0x44] sm:$0xf]
      %v1426 = vld [vmem:[%s1407 + $0x48] sm:$0xf]
      %v1427 = vld [vmem:[%s1407 + $0x4c] sm:$0xf]
      %v1428 = vld [vmem:[%s1407 + $0x50] sm:$0xf]
      %v1429 = vld [vmem:[%s1407 + $0x54] sm:$0xf]
      %v1430 = vld [vmem:[%s1407 + $0x58] sm:$0xf]
      %v1431 = vld [vmem:[%s1407 + $0x5c] sm:$0xf]
      %v1432 = vld [vmem:[%s1407 + $0x60] sm:$0xf]
      %v1433 = vld [vmem:[%s1407 + $0x64] sm:$0xf]
      %v1434 = vld [vmem:[%s1407 + $0x68] sm:$0xf]
      %v1435 = vld [vmem:[%s1407 + $0x6c] sm:$0xf]
      %v1436 = vld [vmem:[%s1407 + $0x70] sm:$0xf]
      %v1437 = vld [vmem:[%s1407 + $0x74] sm:$0xf]
      %v1438 = vld [vmem:[%s1407 + $0x78] sm:$0xf]
      %v1439 = vld [vmem:[%s1407 + $0x7c] sm:$0xf]
      %v1456 = vunpack.c.l.b16 %v1424
      %v1457 = vunpack.c.l.b16 %v1425
      %v1458 = vunpack.c.l.b16 %v1426
      %v1459 = vunpack.c.l.b16 %v1427
      %v1460 = vunpack.c.l.b16 %v1428
      %v1461 = vunpack.c.l.b16 %v1429
      %v1462 = vunpack.c.l.b16 %v1430
      %v1463 = vunpack.c.l.b16 %v1431
      %v1464 = vunpack.c.l.b16 %v1432
      %v1465 = vunpack.c.l.b16 %v1433
      %v1466 = vunpack.c.l.b16 %v1434
      %v1467 = vunpack.c.l.b16 %v1435
      %v1468 = vunpack.c.l.b16 %v1436
      %v1469 = vunpack.c.l.b16 %v1437
      %v1470 = vunpack.c.l.b16 %v1438
      %v1471 = vunpack.c.l.b16 %v1439
      %v1472 = vpack.c.b16 %v1457, %v1456
      %v1473 = vpack.c.b16 %v1459, %v1458
      %v1474 = vpack.c.b16 %v1461, %v1460
      %v1475 = vpack.c.b16 %v1463, %v1462
      %v1476 = vpack.c.b16 %v1465, %v1464
      %v1477 = vpack.c.b16 %v1467, %v1466
      %v1478 = vpack.c.b16 %v1469, %v1468
      %v1479 = vpack.c.b16 %v1471, %v1470
      %1488 = vmatprep.subr.bf16.mxu0 0
      %1489 = vmatpush1.bf16.msra.mxu0 %v1479
      %1490 = vmatprep.subr.bf16.mxu0 0
      %1491 = vmatpush1.bf16.msra.mxu0 %v1478
      %1492 = vmatprep.subr.bf16.mxu0 0
      %1493 = vmatpush1.bf16.msra.mxu0 %v1477
      %1494 = vmatprep.subr.bf16.mxu0 0
      %1495 = vmatpush1.bf16.msra.mxu0 %v1476
      %1496 = vmatprep.subr.bf16.mxu0 0
      %1497 = vmatpush1.bf16.msra.mxu0 %v1475
      %1498 = vmatprep.subr.bf16.mxu0 0
      %1499 = vmatpush1.bf16.msra.mxu0 %v1474
      %1500 = vmatprep.subr.bf16.mxu0 0
      %1501 = vmatpush1.bf16.msra.mxu0 %v1473
      %1502 = vmatprep.subr.bf16.mxu0 0
      %1503 = vmatpush1.bf16.msra.mxu0 %v1472
      %1504 = vmatprep.subr.bf16.mxu0 0
      %1505 = vmatpush2.bf16.msra.mxu0 0
      %1506 = vmatprep.subr.bf16.mxu0 0
      %1507 = vmatpush2.bf16.msra.mxu0 0
      %1508 = vmatprep.subr.bf16.mxu0 0
      %1509 = vmatpush2.bf16.msra.mxu0 0
      %1510 = vmatprep.subr.bf16.mxu0 0
      %1511 = vmatpush2.bf16.msra.mxu0 0
      %1512 = vmatprep.subr.bf16.mxu0 0
      %1513 = vmatpush2.bf16.msra.mxu0 0
      %1514 = vmatprep.subr.bf16.mxu0 0
      %1515 = vmatpush2.bf16.msra.mxu0 0
      %1516 = vmatprep.subr.bf16.mxu0 0
      %1517 = vmatpush2.bf16.msra.mxu0 0
      %1518 = vmatprep.subr.bf16.mxu0 0
      %1519 = vmatpush2.bf16.msra.mxu0 0
      %1520 = vmatprep.mubr.bf16.mxu0 0
      %1521 = vmatmul.mubr.bf16.gmra.mxu0 %v1334
      %v1522 = vpop.f32.mrf.mxu0
      %v1523 = vadd.f32 0.0, %v1522
      %v1524 = vpop.f32.mrf.mxu0
      %v1525 = vpop.f32.mrf.mxu0
      %v1526 = vadd.f32 0.0, %v1525
      %v1527 = vpop.f32.mrf.mxu0
      %1528 = vmatprep.mubr.bf16.mxu0 0
      %1529 = vmatmul.mubr.bf16.gmra.mxu0 %v1335
      %v1530 = vpop.f32.mrf.mxu0
      %v1531 = vadd.f32 0.0, %v1530
      %v1532 = vpop.f32.mrf.mxu0
      %v1533 = vpop.f32.mrf.mxu0
      %v1534 = vadd.f32 0.0, %v1533
      %v1535 = vpop.f32.mrf.mxu0
      %1536 = vmatprep.mubr.bf16.mxu0 0
      %1537 = vmatmul.mubr.bf16.gmra.mxu0 %v1336
      %v1538 = vpop.f32.mrf.mxu0
      %v1539 = vadd.f32 0.0, %v1538
      %v1540 = vpop.f32.mrf.mxu0
      %v1541 = vpop.f32.mrf.mxu0
      %v1542 = vadd.f32 0.0, %v1541
      %v1543 = vpop.f32.mrf.mxu0
      %1544 = vmatprep.mubr.bf16.mxu0 0
      %1545 = vmatmul.mubr.bf16.gmra.mxu0 %v1337
      %v1546 = vpop.f32.mrf.mxu0
      %v1547 = vadd.f32 0.0, %v1546
      %v1548 = vpop.f32.mrf.mxu0
      %v1549 = vpop.f32.mrf.mxu0
      %v1550 = vadd.f32 0.0, %v1549
      %v1551 = vpop.f32.mrf.mxu0
      %1552 = vdwg.mxu0
      %v1569 = vunpack.c.l.b16 %v1408
      %v1570 = vunpack.c.l.b16 %v1409
      %v1571 = vunpack.c.l.b16 %v1410
      %v1572 = vunpack.c.l.b16 %v1411
      %v1573 = vunpack.c.l.b16 %v1412
      %v1574 = vunpack.c.l.b16 %v1413
      %v1575 = vunpack.c.l.b16 %v1414
      %v1576 = vunpack.c.l.b16 %v1415
      %v1577 = vunpack.c.l.b16 %v1416
      %v1578 = vunpack.c.l.b16 %v1417
      %v1579 = vunpack.c.l.b16 %v1418
      %v1580 = vunpack.c.l.b16 %v1419
      %v1581 = vunpack.c.l.b16 %v1420
      %v1582 = vunpack.c.l.b16 %v1421
      %v1583 = vunpack.c.l.b16 %v1422
      %v1584 = vunpack.c.l.b16 %v1423
      %v1585 = vpack.c.b16 %v1570, %v1569
      %v1586 = vpack.c.b16 %v1572, %v1571
      %v1587 = vpack.c.b16 %v1574, %v1573
      %v1588 = vpack.c.b16 %v1576, %v1575
      %v1589 = vpack.c.b16 %v1578, %v1577
      %v1590 = vpack.c.b16 %v1580, %v1579
      %v1591 = vpack.c.b16 %v1582, %v1581
      %v1592 = vpack.c.b16 %v1584, %v1583
      %1601 = vmatprep.subr.bf16.mxu0 0
      %1602 = vmatpush1.bf16.msra.mxu0 %v1592
      %1603 = vmatprep.subr.bf16.mxu0 0
      %1604 = vmatpush1.bf16.msra.mxu0 %v1591
      %1605 = vmatprep.subr.bf16.mxu0 0
      %1606 = vmatpush1.bf16.msra.mxu0 %v1590
      %1607 = vmatprep.subr.bf16.mxu0 0
      %1608 = vmatpush1.bf16.msra.mxu0 %v1589
      %1609 = vmatprep.subr.bf16.mxu0 0
      %1610 = vmatpush1.bf16.msra.mxu0 %v1588
      %1611 = vmatprep.subr.bf16.mxu0 0
      %1612 = vmatpush1.bf16.msra.mxu0 %v1587
      %1613 = vmatprep.subr.bf16.mxu0 0
      %1614 = vmatpush1.bf16.msra.mxu0 %v1586
      %1615 = vmatprep.subr.bf16.mxu0 0
      %1616 = vmatpush1.bf16.msra.mxu0 %v1585
      %1617 = vmatprep.subr.bf16.mxu0 0
      %1618 = vmatpush2.bf16.msra.mxu0 0
      %1619 = vmatprep.subr.bf16.mxu0 0
      %1620 = vmatpush2.bf16.msra.mxu0 0
      %1621 = vmatprep.subr.bf16.mxu0 0
      %1622 = vmatpush2.bf16.msra.mxu0 0
      %1623 = vmatprep.subr.bf16.mxu0 0
      %1624 = vmatpush2.bf16.msra.mxu0 0
      %1625 = vmatprep.subr.bf16.mxu0 0
      %1626 = vmatpush2.bf16.msra.mxu0 0
      %1627 = vmatprep.subr.bf16.mxu0 0
      %1628 = vmatpush2.bf16.msra.mxu0 0
      %1629 = vmatprep.subr.bf16.mxu0 0
      %1630 = vmatpush2.bf16.msra.mxu0 0
      %1631 = vmatprep.subr.bf16.mxu0 0
      %1632 = vmatpush2.bf16.msra.mxu0 0
      %1633 = vmatprep.mubr.bf16.mxu0 0
      %1634 = vmatmul.mubr.bf16.gmra.mxu0 %v1403
      %v1635 = vpop.f32.mrf.mxu0
      %v1636 = vadd.f32 %v1523, %v1635
      %v1637 = vpop.f32.mrf.mxu0
      %v1638 = vpop.f32.mrf.mxu0
      %v1639 = vadd.f32 %v1526, %v1638
      %v1640 = vpop.f32.mrf.mxu0
      %1641 = vmatprep.mubr.bf16.mxu0 0
      %1642 = vmatmul.mubr.bf16.gmra.mxu0 %v1404
      %v1643 = vpop.f32.mrf.mxu0
      %v1644 = vadd.f32 %v1531, %v1643
      %v1645 = vpop.f32.mrf.mxu0
      %v1646 = vpop.f32.mrf.mxu0
      %v1647 = vadd.f32 %v1534, %v1646
      %v1648 = vpop.f32.mrf.mxu0
      %1649 = vmatprep.mubr.bf16.mxu0 0
      %1650 = vmatmul.mubr.bf16.gmra.mxu0 %v1405
      %v1651 = vpop.f32.mrf.mxu0
      %v1652 = vadd.f32 %v1539, %v1651
      %v1653 = vpop.f32.mrf.mxu0
      %v1654 = vpop.f32.mrf.mxu0
      %v1655 = vadd.f32 %v1542, %v1654
      %v1656 = vpop.f32.mrf.mxu0
      %1657 = vmatprep.mubr.bf16.mxu0 0
      %1658 = vmatmul.mubr.bf16.gmra.mxu0 %v1406
      %v1659 = vpop.f32.mrf.mxu0
      %v1660 = vadd.f32 %v1547, %v1659
      %v1661 = vpop.f32.mrf.mxu0
      %v1662 = vpop.f32.mrf.mxu0
      %v1663 = vadd.f32 %v1550, %v1662
      %v1664 = vpop.f32.mrf.mxu0
      %1665 = vdwg.mxu0
      %s1666 = scalar_lea.vmem %s3, 3
      %v1667 = vld [vmem:[%s1666] sm:$0x1]
      %v1669 = vlaneseq
      %v1670 = vshrl.u32 %v1669, 7
      %v1671 = vsub.s32 0, %v1670
      %v1672 = vrot.slane %v1667, %v1671
      %v1674 = vadd.f32 %v1636, %v1672
      %v1675 = vadd.f32 %v1639, %v1672
      %v1676 = vadd.f32 %v1644, %v1672
      %v1677 = vadd.f32 %v1647, %v1672
      %v1678 = vadd.f32 %v1652, %v1672
      %v1679 = vadd.f32 %v1655, %v1672
      %v1680 = vadd.f32 %v1660, %v1672
      %v1681 = vadd.f32 %v1663, %v1672
      %v1682 = vmax.f32 %v1674, 0.0
      %v1683 = vmax.f32 %v1675, 0.0
      %v1684 = vmax.f32 %v1676, 0.0
      %v1685 = vmax.f32 %v1677, 0.0
      %v1686 = vmax.f32 %v1678, 0.0
      %v1687 = vmax.f32 %v1679, 0.0
      %v1688 = vmax.f32 %v1680, 0.0
      %v1689 = vmax.f32 %v1681, 0.0
      %1690 = vst [vmem:[%s217] sm:$0xff] %v1682
      %1691 = vst [vmem:[%s217 + $0x8] sm:$0xff] %v1683
      %1692 = vst [vmem:[%s217 + $0x10] sm:$0xff] %v1684
      %1693 = vst [vmem:[%s217 + $0x18] sm:$0xff] %v1685
      %1694 = vst [vmem:[%s217 + $0x20] sm:$0xff] %v1686
      %1695 = vst [vmem:[%s217 + $0x28] sm:$0xff] %v1687
      %1696 = vst [vmem:[%s217 + $0x30] sm:$0xff] %v1688
      %1697 = vst [vmem:[%s217 + $0x38] sm:$0xff] %v1689
      %p1698 = scmp.lt.s32.totalorder %s15, 3
      %s1699 = scalar_select %p1698, %s15, 3
      %s1700 = smul.addr %s1699, 8
      %s1701 = smul.addr %s1700, 8
      %s1702 = scalar_lea.vmem %s4, %s1701
      // Predicated region
      $region37: #{sage_forward.1} parent=35 // pred_check
        %p1703 = pneg %p127
      $region38: #{sage_forward.1} parent=35 // pred_check_branch
        %1705 = sbr.rel (%p1703) target = $region40
      $region39: #{sage_forward.1} parent=35 // pred_region
        _
      $region40: #{sage_forward.1} parent=35 // pred_fallthru
        _
    $region36: #{sage_forward.1} parent=5 // pred_fallthru
      _
    %p1706 = scmp.le.s32.totalorder 2, %s10
    // Predicated region
    $region41: #{sage_forward.1} parent=5 // pred_check
      %p1707 = pneg %p1706
    $region42: #{sage_forward.1} parent=5 // pred_check_branch
      %1709 = sbr.rel (%p1707) target = $region44
    $region43: #{sage_forward.1} parent=5 // pred_region
      %s1710 = ssub.s32 %s10, 2
      // Predicated region
      $region45: #{sage_forward.1} parent=43 // pred_check
        %p1711 = pneg %p133
      $region46: #{sage_forward.1} parent=43 // pred_check_branch
        %1713 = sbr.rel (%p1711) target = $region48
      $region47: #{sage_forward.1} parent=43 // pred_region
        %p1714 = scmp.lt.s32.totalorder %s16, 3
        %s1715 = scalar_select %p1714, %s16, 3
        %s1716 = smul.addr %s1715, 8
        %s1717 = smul.addr %s1716, 8
        %s1718 = scalar_lea.vmem %s4, %s1717
      $region48: #{sage_forward.1} parent=43 // pred_fallthru
        _
    $region44: #{sage_forward.1} parent=5 // pred_fallthru
      _
  $region6: #{sage_forward.1} parent=0 // loop_footer
    %s14 = sadd.s32 1, %s10
  $region7: #{sage_forward.1} parent=0 // loop_footer_branch
    %9 = sbr.rel target = $region3
  $region8: #{sage_forward.1} parent=0 // loop_exit
    _

</llo_original>
